<compile_context>
chip_gen: v5e
topology: v5e:2x2
jax: 0.10.0
libtpu: 0.0.40
codegen_flags: <defaults>
</compile_context>

<pallas_src>
import functools
import numpy as np
import jax
import jax.numpy as jnp
from jax.experimental import pallas as pl
from jax.experimental.pallas import tpu as pltpu

NEG_SLOPE = 0.05  # LeakyReLU(0.05)


def _lrelu(v):
    return jnp.where(v > 0, v, NEG_SLOPE * v)


def bilinear_matrix(in_size, out_size):
    """PyTorch bilinear interpolation matrix (align_corners=False), numpy f32."""
    scale = in_size / out_size
    j = np.arange(out_size)
    src = (j + 0.5) * scale - 0.5
    src = np.clip(src, 0.0, None)
    i0 = np.minimum(np.floor(src).astype(np.int64), in_size - 1)
    i1 = np.minimum(i0 + 1, in_size - 1)
    frac = (src - i0).astype(np.float32)
    A = np.zeros((out_size, in_size), dtype=np.float32)
    A[j, i0] += (1.0 - frac)
    A[j, i1] += frac
    return A


def _tensorcores_per_chip():
    # v7x has 2 TensorCores per chip; v5e/v6e have 1.  Best-effort detection;
    # the fallback (1) is always functionally correct.
    try:
        kind = jax.devices()[0].device_kind.lower()
    except Exception:
        return 1
    return 2 if ("v7" in kind or "7x" in kind) else 1


def _block_kernel(c_in, c_tot, c_pad, c_out, B_per, S, shifts,
                  x_ref, kt_ref, mask_ref, w_ref, b_ref, out_ref, ur_ref):
    SS = S * S

    # (1) Joint bilinear upsample of x and residuals for every batch element in
    #     this grid step: one lane-dense bf16 MXU matmul, f32 accumulation.
    uall = jnp.dot(x_ref[...], kt_ref[...],
                   preferred_element_type=jnp.float32)       # (B_per*c_pad, SS) f32

    w = w_ref[...]        # (2*c_out, 9*c_pad) bf16 fused 3x3 + 1x1 weights
    bias = b_ref[...]     # (2*c_out, 1)       f32  [b3 ; b1]

    for b in range(B_per):                                   # static, small
        g = uall[b * c_pad:(b + 1) * c_pad, :]               # aligned (c_pad, SS)
        ur_ref[b, :, :] = g[c_in:c_tot, :]                   # upsampled residuals out

        # (2) 3x3 taps as in-register lane rolls + exact 0/1 edge-mask multiply,
        #     stacked along K.  Each piece is a full 8-sublane tile (c_pad rows),
        #     so the concatenate is tile-aligned; the wrapped/invalid positions
        #     are exactly the ones zeroed by the mask.
        parts = []
        for t, d in enumerate(shifts):
            if d == 0:
                parts.append(g)                              # centre tap: no mask
            else:
                parts.append(pltpu.roll(g, shift=(-d) % SS, axis=1)
                             * mask_ref[t:t + 1, :])
        stacked = jnp.concatenate(parts, axis=0).astype(jnp.bfloat16)  # (9*c_pad, SS)

        # (3) Single fused MXU matmul: rows [0:c_out] = 3x3 deconv-equivalent
        #     conv, rows [c_out:2*c_out] = 1x1 residual deconv.
        pre = jnp.dot(w, stacked, preferred_element_type=jnp.float32) + bias
        after = _lrelu(_lrelu(pre[:c_out, :]))
        res = _lrelu(pre[c_out:, :])
        out_ref[b, :, :] = _lrelu(after + res)


def summing_residual_deconv_block(residuals, x, params, out_size):
    N, c_in, H, W = x.shape
    Nr, r_ch, Hr, Wr = residuals.shape
    assert N == Nr and (Hr, Wr) == (H, W)
    c_out = params["b3"].shape[0]
    S = out_size
    HW, SS = H * W, S * S
    c_tot = c_in + r_ch
    c_pad = ((c_tot + 7) // 8) * 8          # sublane-tile aligned channel group

    # Grid strategy: one batch element per TensorCore on multi-core chips (v7x);
    # otherwise collapse to a single grid step (v5e/v6e: no per-step overhead,
    # kron weight tiles loaded once, batch folded into the matmul M dim).
    cores = _tensorcores_per_chip()
    G = cores if (cores > 1 and N % cores == 0) else 1
    B_per = N // G
    # TODO(synk): if N == 1 on v7x, split the S*S lane dim across the two cores.

    # Bilinear upsample as one matrix: kron(A_h, A_w)^T (exact in bf16 here).
    A_h = bilinear_matrix(H, S)
    A_w = bilinear_matrix(W, S)
    kt = jnp.asarray(np.kron(A_h, A_w).T, jnp.bfloat16)      # (H*W, S*S)

    # Per-tap shifts and exact 0/1 edge-validity masks over flattened (s*S + t).
    shifts = tuple((kh - 1) * S + (kw - 1) for kh in range(3) for kw in range(3))
    masks = np.zeros((9, SS), np.float32)
    rng = np.arange(S)
    for kh in range(3):
        for kw in range(3):
            dh, dw = kh - 1, kw - 1
            mh = (rng + dh >= 0) & (rng + dh < S)
            mw = (rng + dw >= 0) & (rng + dw < S)
            masks[kh * 3 + kw] = (mh[:, None] & mw[None, :]).reshape(-1)
    masks = jnp.asarray(masks)

    # Fused weight: top c_out rows = 3x3 conv taps laid out as (tap, channel)
    # along K = 9*c_pad; bottom c_out rows = 1x1 residual conv hitting the
    # residual channels of the centre tap (t=4).  Padded channels are zero.
    w3k = jnp.transpose(params["w3_conv"].astype(jnp.float32), (2, 3, 0, 1)
                        ).reshape(9, c_out, c_in)            # [t, o, c]
    W_top = jnp.zeros((c_out, 9, c_pad), jnp.float32)
    W_top = W_top.at[:, :, :c_in].set(jnp.transpose(w3k, (1, 0, 2)))
    W_top = W_top.reshape(c_out, 9 * c_pad)
    W_bot = jnp.zeros((c_out, 9 * c_pad), jnp.float32)
    w1 = params["w1"][:, :, 0, 0].astype(jnp.float32)        # (r_ch, c_out)
    W_bot = W_bot.at[:, 4 * c_pad + c_in:4 * c_pad + c_tot].set(w1.T)
    W_all = jnp.concatenate([W_top, W_bot], axis=0).astype(jnp.bfloat16)

    b_all = jnp.concatenate([params["b3"], params["b1"]]
                            ).reshape(2 * c_out, 1).astype(jnp.float32)

    # Lane-dense input: per batch element, c_pad channel rows (x ++ residuals ++
    # zero pad) over the flattened H*W lanes; batch folded into rows per step.
    xall = jnp.zeros((N, c_pad, HW), jnp.float32)
    xall = xall.at[:, :c_in, :].set(x.reshape(N, c_in, HW))
    xall = xall.at[:, c_in:c_tot, :].set(residuals.reshape(N, r_ch, HW))
    xall = xall.reshape(G, B_per * c_pad, HW).astype(jnp.bfloat16)

    kernel = functools.partial(_block_kernel, c_in, c_tot, c_pad, c_out,
                               B_per, S, shifts)

    out_flat, ur_flat = pl.pallas_call(
        kernel,
        out_shape=(jax.ShapeDtypeStruct((G, B_per, c_out, SS), jnp.float32),
                   jax.ShapeDtypeStruct((G, B_per, r_ch, SS), jnp.float32)),
        grid=(G,),
        in_specs=[
            pl.BlockSpec((None, B_per * c_pad, HW), lambda g: (g, 0, 0)),  # x ++ residuals (bf16)
            pl.BlockSpec((HW, SS), lambda g: (0, 0)),                      # kron upsample matrix (bf16)
            pl.BlockSpec((9, SS), lambda g: (0, 0)),                       # tap edge masks
            pl.BlockSpec((2 * c_out, 9 * c_pad), lambda g: (0, 0)),        # fused conv weights (bf16)
            pl.BlockSpec((2 * c_out, 1), lambda g: (0, 0)),                # fused biases [b3; b1]
        ],
        out_specs=(
            pl.BlockSpec((None, B_per, c_out, SS), lambda g: (g, 0, 0, 0)),
            pl.BlockSpec((None, B_per, r_ch, SS), lambda g: (g, 0, 0, 0)),
        ),
        compiler_params=pltpu.CompilerParams(dimension_semantics=("parallel",)),
    )(xall, kt, masks, W_all, b_all)

    return (out_flat.reshape(N, c_out, S, S),
            ur_flat.reshape(N, r_ch, S, S))


def ref_forward(residuals, x, params, A_h, A_wT):
    """Pure-JAX f32 reference of the module forward (same interpolation matrices)."""
    def up(t):
        return jnp.einsum('sh,nchw,wt->ncst', A_h, t, A_wT)
    Ux, Ur = up(x), up(residuals)
    S = A_h.shape[0]
    w3c = params["w3_conv"]
    Uxp = jnp.pad(Ux, ((0, 0), (0, 0), (1, 1), (1, 1)))
    conv = params["b3"][None, :, None, None]
    for kh in range(3):
        for kw in range(3):
            conv = conv + jnp.einsum('ncst,oc->nost',
                                     Uxp[:, :, kh:kh + S, kw:kw + S],
                                     w3c[:, :, kh, kw])
    after = _lrelu(_lrelu(conv))
    w1 = params["w1"][:, :, 0, 0]
    res = jnp.einsum('ncst,co->nost', Ur, w1) + params["b1"][None, :, None, None]
    res = _lrelu(res)
    return _lrelu(after + res), Ur


if __name__ == "__main__":
    N, c_in, c_out = 2, 4, 8
    H = W = 16
    r_ch, S = 2, 32   # residual_size=2, size=32

    key = jax.random.PRNGKey(0)
    k1, k2, k3, k4, k5, k6 = jax.random.split(key, 6)
    x = jax.random.normal(k1, (N, c_in, H, W), jnp.float32)
    residuals = jax.random.normal(k2, (N, r_ch, H, W), jnp.float32)

    # ConvTranspose2d weight layouts.
    w3_t = jax.random.normal(k3, (c_in, c_out, 3, 3), jnp.float32) * 0.1   # deconv 3x3
    b3 = jax.random.normal(k4, (c_out,), jnp.float32) * 0.1
    w1 = jax.random.normal(k5, (r_ch, c_out, 1, 1), jnp.float32) * 0.1     # deconv 1x1
    b1 = jax.random.normal(k6, (c_out,), jnp.float32) * 0.1

    # ConvTranspose2d(k=3, s=1, p=1) -> equivalent Conv2d weight (flip + transpose).
    w3_conv = jnp.transpose(w3_t, (1, 0, 2, 3))[:, :, ::-1, ::-1]
    params = dict(w3_conv=w3_conv, b3=b3, w1=w1, b1=b1)

    out, ur = summing_residual_deconv_block(residuals, x, params, S)
    out = jax.block_until_ready(out)
    ur = jax.block_until_ready(ur)

    # Sanity check against a pure-JAX f32 reference (kernel uses bf16 operands
    # with f32 accumulation, so tolerances are loosened vs pure f32).
    A_h = jnp.asarray(bilinear_matrix(H, S))
    A_wT = jnp.asarray(bilinear_matrix(W, S)).T
    ref_out, ref_ur = ref_forward(residuals, x, params, A_h, A_wT)
    assert out.shape == (N, c_out, S, S) and ur.shape == (N, r_ch, S, S)
    assert jnp.allclose(out, ref_out, atol=2e-2, rtol=2e-2)
    assert jnp.allclose(ur, ref_ur, atol=2e-2, rtol=2e-2)

    print("KERNEL_OK")
</pallas_src>

<mosaic_0001>
module attributes {stable_mosaic.version = 11 : i64} {
  func.func @_block_kernel(%arg0: i32, %arg1: memref<1x16x256xbf16, #tpu.memory_space<vmem>>, %arg2: memref<256x1024xbf16, #tpu.memory_space<vmem>>, %arg3: memref<9x1024xf32, #tpu.memory_space<vmem>>, %arg4: memref<16x72xbf16, #tpu.memory_space<vmem>>, %arg5: memref<16x1xf32, #tpu.memory_space<vmem>>, %arg6: memref<1x2x8x1024xf32, #tpu.memory_space<vmem>>, %arg7: memref<1x2x2x1024xf32, #tpu.memory_space<vmem>>) attributes {dimension_semantics = [#tpu.dimension_semantics<parallel>], iteration_bounds = array<i64: 1>, scalar_prefetch = 0 : i64, scratch_operands = 0 : i64, tpu.core_type = #tpu.core_type<tc>, window_params = [{transform_indices = @transform_0, window_bounds = array<i64: 1, 16, 256>}, {pipeline_mode = #tpu.pipeline_mode<synchronous>, transform_indices = @transform_1, window_bounds = array<i64: 256, 1024>}, {pipeline_mode = #tpu.pipeline_mode<synchronous>, transform_indices = @transform_2, window_bounds = array<i64: 9, 1024>}, {pipeline_mode = #tpu.pipeline_mode<synchronous>, transform_indices = @transform_3, window_bounds = array<i64: 16, 72>}, {pipeline_mode = #tpu.pipeline_mode<synchronous>, transform_indices = @transform_4, window_bounds = array<i64: 16, 1>}, {transform_indices = @transform_5, window_bounds = array<i64: 1, 2, 8, 1024>}, {transform_indices = @transform_6, window_bounds = array<i64: 1, 2, 2, 1024>}]} {
    %c0 = arith.constant 0 : index
    %c0_0 = arith.constant 0 : index
    %c0_1 = arith.constant 0 : index
    %0 = vector.load %arg1[%c0, %c0_0, %c0_1] : memref<1x16x256xbf16, #tpu.memory_space<vmem>>, vector<1x16x256xbf16>
    %1 = vector.shape_cast %0 : vector<1x16x256xbf16> to vector<16x256xbf16>
    %c0_2 = arith.constant 0 : index
    %c0_3 = arith.constant 0 : index
    %2 = vector.load %arg2[%c0_2, %c0_3] : memref<256x1024xbf16, #tpu.memory_space<vmem>>, vector<256x1024xbf16>
    %cst = arith.constant dense<0.000000e+00> : vector<16x1024xf32>
    %3 = tpu.matmul %1, %2, %cst {dimension_numbers = #tpu.dot_dimension_numbers<[1], [0], [0], [1], [0, 0, 1, 1], [], []>} : vector<16x256xbf16>, vector<256x1024xbf16>, vector<16x1024xf32> -> vector<16x1024xf32>
    %c0_4 = arith.constant 0 : index
    %c0_5 = arith.constant 0 : index
    %4 = vector.load %arg4[%c0_4, %c0_5] : memref<16x72xbf16, #tpu.memory_space<vmem>>, vector<16x72xbf16>
    %c0_6 = arith.constant 0 : index
    %c0_7 = arith.constant 0 : index
    %5 = vector.load %arg5[%c0_6, %c0_7] : memref<16x1xf32, #tpu.memory_space<vmem>>, vector<16x1xf32>
    %6 = vector.extract_strided_slice %3 {offsets = [0, 0], sizes = [8, 1024], strides = [1, 1]} : vector<16x1024xf32> to vector<8x1024xf32>
    %7 = vector.extract_strided_slice %6 {offsets = [4, 0], sizes = [2, 1024], strides = [1, 1]} : vector<8x1024xf32> to vector<2x1024xf32>
    %c0_8 = arith.constant 0 : index
    %c0_9 = arith.constant 0 : index
    %c0_10 = arith.constant 0 : index
    %c0_11 = arith.constant 0 : index
    %8 = vector.load %arg7[%c0_8, %c0_9, %c0_10, %c0_11] : memref<1x2x2x1024xf32, #tpu.memory_space<vmem>>, vector<1x1x2x1024xf32>
    %9 = vector.shape_cast %8 : vector<1x1x2x1024xf32> to vector<2x1024xf32>
    %10 = vector.shape_cast %7 : vector<2x1024xf32> to vector<1x1x2x1024xf32>
    tpu.vector_store %arg7[%c0_8, %c0_9, %c0_10, %c0_11], %10 {strides = array<i32>} : memref<1x2x2x1024xf32, #tpu.memory_space<vmem>>, vector<1x1x2x1024xf32>,
    %c33_i32 = arith.constant 33 : i32
    %11 = tpu.dynamic_rotate %6 by %c33_i32 dim 1 : vector<8x1024xf32>, i32 -> vector<8x1024xf32>
    %c0_12 = arith.constant 0 : index
    %c0_13 = arith.constant 0 : index
    %12 = vector.load %arg3[%c0_12, %c0_13] : memref<9x1024xf32, #tpu.memory_space<vmem>>, vector<1x1024xf32>
    %13 = vector.broadcast %12 : vector<1x1024xf32> to vector<8x1024xf32>
    %14 = arith.mulf %11, %13 : vector<8x1024xf32>
    %c32_i32 = arith.constant 32 : i32
    %15 = tpu.dynamic_rotate %6 by %c32_i32 dim 1 : vector<8x1024xf32>, i32 -> vector<8x1024xf32>
    %c1 = arith.constant 1 : index
    %c0_14 = arith.constant 0 : index
    %16 = vector.load %arg3[%c1, %c0_14] : memref<9x1024xf32, #tpu.memory_space<vmem>>, vector<1x1024xf32>
    %17 = vector.broadcast %16 : vector<1x1024xf32> to vector<8x1024xf32>
    %18 = arith.mulf %15, %17 : vector<8x1024xf32>
    %c31_i32 = arith.constant 31 : i32
    %19 = tpu.dynamic_rotate %6 by %c31_i32 dim 1 : vector<8x1024xf32>, i32 -> vector<8x1024xf32>
    %c2 = arith.constant 2 : index
    %c0_15 = arith.constant 0 : index
    %20 = vector.load %arg3[%c2, %c0_15] : memref<9x1024xf32, #tpu.memory_space<vmem>>, vector<1x1024xf32>
    %21 = vector.broadcast %20 : vector<1x1024xf32> to vector<8x1024xf32>
    %22 = arith.mulf %19, %21 : vector<8x1024xf32>
    %c1_i32 = arith.constant 1 : i32
    %23 = tpu.dynamic_rotate %6 by %c1_i32 dim 1 : vector<8x1024xf32>, i32 -> vector<8x1024xf32>
    %c3 = arith.constant 3 : index
    %c0_16 = arith.constant 0 : index
    %24 = vector.load %arg3[%c3, %c0_16] : memref<9x1024xf32, #tpu.memory_space<vmem>>, vector<1x1024xf32>
    %25 = vector.broadcast %24 : vector<1x1024xf32> to vector<8x1024xf32>
    %26 = arith.mulf %23, %25 : vector<8x1024xf32>
    %c1023_i32 = arith.constant 1023 : i32
    %27 = tpu.dynamic_rotate %6 by %c1023_i32 dim 1 : vector<8x1024xf32>, i32 -> vector<8x1024xf32>
    %c5 = arith.constant 5 : index
    %c0_17 = arith.constant 0 : index
    %28 = vector.load %arg3[%c5, %c0_17] : memref<9x1024xf32, #tpu.memory_space<vmem>>, vector<1x1024xf32>
    %29 = vector.broadcast %28 : vector<1x1024xf32> to vector<8x1024xf32>
    %30 = arith.mulf %27, %29 : vector<8x1024xf32>
    %c993_i32 = arith.constant 993 : i32
    %31 = tpu.dynamic_rotate %6 by %c993_i32 dim 1 : vector<8x1024xf32>, i32 -> vector<8x1024xf32>
    %c6 = arith.constant 6 : index
    %c0_18 = arith.constant 0 : index
    %32 = vector.load %arg3[%c6, %c0_18] : memref<9x1024xf32, #tpu.memory_space<vmem>>, vector<1x1024xf32>
    %33 = vector.broadcast %32 : vector<1x1024xf32> to vector<8x1024xf32>
    %34 = arith.mulf %31, %33 : vector<8x1024xf32>
    %c992_i32 = arith.constant 992 : i32
    %35 = tpu.dynamic_rotate %6 by %c992_i32 dim 1 : vector<8x1024xf32>, i32 -> vector<8x1024xf32>
    %c7 = arith.constant 7 : index
    %c0_19 = arith.constant 0 : index
    %36 = vector.load %arg3[%c7, %c0_19] : memref<9x1024xf32, #tpu.memory_space<vmem>>, vector<1x1024xf32>
    %37 = vector.broadcast %36 : vector<1x1024xf32> to vector<8x1024xf32>
    %38 = arith.mulf %35, %37 : vector<8x1024xf32>
    %c991_i32 = arith.constant 991 : i32
    %39 = tpu.dynamic_rotate %6 by %c991_i32 dim 1 : vector<8x1024xf32>, i32 -> vector<8x1024xf32>
    %c8 = arith.constant 8 : index
    %c0_20 = arith.constant 0 : index
    %40 = vector.load %arg3[%c8, %c0_20] : memref<9x1024xf32, #tpu.memory_space<vmem>>, vector<1x1024xf32>
    %41 = vector.broadcast %40 : vector<1x1024xf32> to vector<8x1024xf32>
    %42 = arith.mulf %39, %41 : vector<8x1024xf32>
    %43 = tpu.concatenate %14, %18, %22, %26, %6, %30, %34, %38, %42 in 0 : vector<8x1024xf32>, vector<8x1024xf32>, vector<8x1024xf32>, vector<8x1024xf32>, vector<8x1024xf32>, vector<8x1024xf32>, vector<8x1024xf32>, vector<8x1024xf32>, vector<8x1024xf32> -> vector<72x1024xf32>
    %44 = arith.truncf %43 : vector<72x1024xf32> to vector<72x1024xbf16>
    %cst_21 = arith.constant dense<0.000000e+00> : vector<16x1024xf32>
    %45 = tpu.matmul %4, %44, %cst_21 {dimension_numbers = #tpu.dot_dimension_numbers<[1], [0], [0], [1], [0, 0, 1, 1], [], []>} : vector<16x72xbf16>, vector<72x1024xbf16>, vector<16x1024xf32> -> vector<16x1024xf32>
    %46 = vector.broadcast %5 : vector<16x1xf32> to vector<16x1024xf32>
    %47 = arith.addf %45, %46 : vector<16x1024xf32>
    %48 = vector.extract_strided_slice %47 {offsets = [0, 0], sizes = [8, 1024], strides = [1, 1]} : vector<16x1024xf32> to vector<8x1024xf32>
    %cst_22 = arith.constant 0.000000e+00 : f32
    %49 = vector.broadcast %cst_22 : f32 to vector<8x1024xf32>
    %50 = arith.cmpf ogt, %48, %49 : vector<8x1024xf32>
    %cst_23 = arith.constant 5.000000e-02 : f32
    %51 = vector.broadcast %cst_23 : f32 to vector<8x1024xf32>
    %52 = arith.mulf %51, %48 : vector<8x1024xf32>
    %53 = arith.select %50, %48, %52 : vector<8x1024xi1>, vector<8x1024xf32>
    %cst_24 = arith.constant 0.000000e+00 : f32
    %54 = vector.broadcast %cst_24 : f32 to vector<8x1024xf32>
    %55 = arith.cmpf ogt, %53, %54 : vector<8x1024xf32>
    %cst_25 = arith.constant 5.000000e-02 : f32
    %56 = vector.broadcast %cst_25 : f32 to vector<8x1024xf32>
    %57 = arith.mulf %56, %53 : vector<8x1024xf32>
    %58 = arith.select %55, %53, %57 : vector<8x1024xi1>, vector<8x1024xf32>
    %59 = vector.extract_strided_slice %47 {offsets = [8, 0], sizes = [8, 1024], strides = [1, 1]} : vector<16x1024xf32> to vector<8x1024xf32>
    %cst_26 = arith.constant 0.000000e+00 : f32
    %60 = vector.broadcast %cst_26 : f32 to vector<8x1024xf32>
    %61 = arith.cmpf ogt, %59, %60 : vector<8x1024xf32>
    %cst_27 = arith.constant 5.000000e-02 : f32
    %62 = vector.broadcast %cst_27 : f32 to vector<8x1024xf32>
    %63 = arith.mulf %62, %59 : vector<8x1024xf32>
    %64 = arith.select %61, %59, %63 : vector<8x1024xi1>, vector<8x1024xf32>
    %65 = arith.addf %58, %64 : vector<8x1024xf32>
    %cst_28 = arith.constant 0.000000e+00 : f32
    %66 = vector.broadcast %cst_28 : f32 to vector<8x1024xf32>
    %67 = arith.cmpf ogt, %65, %66 : vector<8x1024xf32>
    %cst_29 = arith.constant 5.000000e-02 : f32
    %68 = vector.broadcast %cst_29 : f32 to vector<8x1024xf32>
    %69 = arith.mulf %68, %65 : vector<8x1024xf32>
    %70 = arith.select %67, %65, %69 : vector<8x1024xi1>, vector<8x1024xf32>
    %c0_30 = arith.constant 0 : index
    %c0_31 = arith.constant 0 : index
    %c0_32 = arith.constant 0 : index
    %c0_33 = arith.constant 0 : index
    %71 = vector.load %arg6[%c0_30, %c0_31, %c0_32, %c0_33] : memref<1x2x8x1024xf32, #tpu.memory_space<vmem>>, vector<1x1x8x1024xf32>
    %72 = vector.shape_cast %71 : vector<1x1x8x1024xf32> to vector<8x1024xf32>
    %73 = vector.shape_cast %70 : vector<8x1024xf32> to vector<1x1x8x1024xf32>
    tpu.vector_store %arg6[%c0_30, %c0_31, %c0_32, %c0_33], %73 {strides = array<i32>} : memref<1x2x8x1024xf32, #tpu.memory_space<vmem>>, vector<1x1x8x1024xf32>,
    %74 = vector.extract_strided_slice %3 {offsets = [8, 0], sizes = [8, 1024], strides = [1, 1]} : vector<16x1024xf32> to vector<8x1024xf32>
    %75 = vector.extract_strided_slice %74 {offsets = [4, 0], sizes = [2, 1024], strides = [1, 1]} : vector<8x1024xf32> to vector<2x1024xf32>
    %c0_34 = arith.constant 0 : index
    %c1_35 = arith.constant 1 : index
    %c0_36 = arith.constant 0 : index
    %c0_37 = arith.constant 0 : index
    %76 = vector.load %arg7[%c0_34, %c1_35, %c0_36, %c0_37] : memref<1x2x2x1024xf32, #tpu.memory_space<vmem>>, vector<1x1x2x1024xf32>
    %77 = vector.shape_cast %76 : vector<1x1x2x1024xf32> to vector<2x1024xf32>
    %78 = vector.shape_cast %75 : vector<2x1024xf32> to vector<1x1x2x1024xf32>
    tpu.vector_store %arg7[%c0_34, %c1_35, %c0_36, %c0_37], %78 {strides = array<i32>} : memref<1x2x2x1024xf32, #tpu.memory_space<vmem>>, vector<1x1x2x1024xf32>,
    %c33_i32_38 = arith.constant 33 : i32
    %79 = tpu.dynamic_rotate %74 by %c33_i32_38 dim 1 : vector<8x1024xf32>, i32 -> vector<8x1024xf32>
    %c0_39 = arith.constant 0 : index
    %c0_40 = arith.constant 0 : index
    %80 = vector.load %arg3[%c0_39, %c0_40] : memref<9x1024xf32, #tpu.memory_space<vmem>>, vector<1x1024xf32>
    %81 = vector.broadcast %80 : vector<1x1024xf32> to vector<8x1024xf32>
    %82 = arith.mulf %79, %81 : vector<8x1024xf32>
    %c32_i32_41 = arith.constant 32 : i32
    %83 = tpu.dynamic_rotate %74 by %c32_i32_41 dim 1 : vector<8x1024xf32>, i32 -> vector<8x1024xf32>
    %c1_42 = arith.constant 1 : index
    %c0_43 = arith.constant 0 : index
    %84 = vector.load %arg3[%c1_42, %c0_43] : memref<9x1024xf32, #tpu.memory_space<vmem>>, vector<1x1024xf32>
    %85 = vector.broadcast %84 : vector<1x1024xf32> to vector<8x1024xf32>
    %86 = arith.mulf %83, %85 : vector<8x1024xf32>
    %c31_i32_44 = arith.constant 31 : i32
    %87 = tpu.dynamic_rotate %74 by %c31_i32_44 dim 1 : vector<8x1024xf32>, i32 -> vector<8x1024xf32>
    %c2_45 = arith.constant 2 : index
    %c0_46 = arith.constant 0 : index
    %88 = vector.load %arg3[%c2_45, %c0_46] : memref<9x1024xf32, #tpu.memory_space<vmem>>, vector<1x1024xf32>
    %89 = vector.broadcast %88 : vector<1x1024xf32> to vector<8x1024xf32>
    %90 = arith.mulf %87, %89 : vector<8x1024xf32>
    %c1_i32_47 = arith.constant 1 : i32
    %91 = tpu.dynamic_rotate %74 by %c1_i32_47 dim 1 : vector<8x1024xf32>, i32 -> vector<8x1024xf32>
    %c3_48 = arith.constant 3 : index
    %c0_49 = arith.constant 0 : index
    %92 = vector.load %arg3[%c3_48, %c0_49] : memref<9x1024xf32, #tpu.memory_space<vmem>>, vector<1x1024xf32>
    %93 = vector.broadcast %92 : vector<1x1024xf32> to vector<8x1024xf32>
    %94 = arith.mulf %91, %93 : vector<8x1024xf32>
    %c1023_i32_50 = arith.constant 1023 : i32
    %95 = tpu.dynamic_rotate %74 by %c1023_i32_50 dim 1 : vector<8x1024xf32>, i32 -> vector<8x1024xf32>
    %c5_51 = arith.constant 5 : index
    %c0_52 = arith.constant 0 : index
    %96 = vector.load %arg3[%c5_51, %c0_52] : memref<9x1024xf32, #tpu.memory_space<vmem>>, vector<1x1024xf32>
    %97 = vector.broadcast %96 : vector<1x1024xf32> to vector<8x1024xf32>
    %98 = arith.mulf %95, %97 : vector<8x1024xf32>
    %c993_i32_53 = arith.constant 993 : i32
    %99 = tpu.dynamic_rotate %74 by %c993_i32_53 dim 1 : vector<8x1024xf32>, i32 -> vector<8x1024xf32>
    %c6_54 = arith.constant 6 : index
    %c0_55 = arith.constant 0 : index
    %100 = vector.load %arg3[%c6_54, %c0_55] : memref<9x1024xf32, #tpu.memory_space<vmem>>, vector<1x1024xf32>
    %101 = vector.broadcast %100 : vector<1x1024xf32> to vector<8x1024xf32>
    %102 = arith.mulf %99, %101 : vector<8x1024xf32>
    %c992_i32_56 = arith.constant 992 : i32
    %103 = tpu.dynamic_rotate %74 by %c992_i32_56 dim 1 : vector<8x1024xf32>, i32 -> vector<8x1024xf32>
    %c7_57 = arith.constant 7 : index
    %c0_58 = arith.constant 0 : index
    %104 = vector.load %arg3[%c7_57, %c0_58] : memref<9x1024xf32, #tpu.memory_space<vmem>>, vector<1x1024xf32>
    %105 = vector.broadcast %104 : vector<1x1024xf32> to vector<8x1024xf32>
    %106 = arith.mulf %103, %105 : vector<8x1024xf32>
    %c991_i32_59 = arith.constant 991 : i32
    %107 = tpu.dynamic_rotate %74 by %c991_i32_59 dim 1 : vector<8x1024xf32>, i32 -> vector<8x1024xf32>
    %c8_60 = arith.constant 8 : index
    %c0_61 = arith.constant 0 : index
    %108 = vector.load %arg3[%c8_60, %c0_61] : memref<9x1024xf32, #tpu.memory_space<vmem>>, vector<1x1024xf32>
    %109 = vector.broadcast %108 : vector<1x1024xf32> to vector<8x1024xf32>
    %110 = arith.mulf %107, %109 : vector<8x1024xf32>
    %111 = tpu.concatenate %82, %86, %90, %94, %74, %98, %102, %106, %110 in 0 : vector<8x1024xf32>, vector<8x1024xf32>, vector<8x1024xf32>, vector<8x1024xf32>, vector<8x1024xf32>, vector<8x1024xf32>, vector<8x1024xf32>, vector<8x1024xf32>, vector<8x1024xf32> -> vector<72x1024xf32>
    %112 = arith.truncf %111 : vector<72x1024xf32> to vector<72x1024xbf16>
    %cst_62 = arith.constant dense<0.000000e+00> : vector<16x1024xf32>
    %113 = tpu.matmul %4, %112, %cst_62 {dimension_numbers = #tpu.dot_dimension_numbers<[1], [0], [0], [1], [0, 0, 1, 1], [], []>} : vector<16x72xbf16>, vector<72x1024xbf16>, vector<16x1024xf32> -> vector<16x1024xf32>
    %114 = vector.broadcast %5 : vector<16x1xf32> to vector<16x1024xf32>
    %115 = arith.addf %113, %114 : vector<16x1024xf32>
    %116 = vector.extract_strided_slice %115 {offsets = [0, 0], sizes = [8, 1024], strides = [1, 1]} : vector<16x1024xf32> to vector<8x1024xf32>
    %cst_63 = arith.constant 0.000000e+00 : f32
    %117 = vector.broadcast %cst_63 : f32 to vector<8x1024xf32>
    %118 = arith.cmpf ogt, %116, %117 : vector<8x1024xf32>
    %cst_64 = arith.constant 5.000000e-02 : f32
    %119 = vector.broadcast %cst_64 : f32 to vector<8x1024xf32>
    %120 = arith.mulf %119, %116 : vector<8x1024xf32>
    %121 = arith.select %118, %116, %120 : vector<8x1024xi1>, vector<8x1024xf32>
    %cst_65 = arith.constant 0.000000e+00 : f32
    %122 = vector.broadcast %cst_65 : f32 to vector<8x1024xf32>
    %123 = arith.cmpf ogt, %121, %122 : vector<8x1024xf32>
    %cst_66 = arith.constant 5.000000e-02 : f32
    %124 = vector.broadcast %cst_66 : f32 to vector<8x1024xf32>
    %125 = arith.mulf %124, %121 : vector<8x1024xf32>
    %126 = arith.select %123, %121, %125 : vector<8x1024xi1>, vector<8x1024xf32>
    %127 = vector.extract_strided_slice %115 {offsets = [8, 0], sizes = [8, 1024], strides = [1, 1]} : vector<16x1024xf32> to vector<8x1024xf32>
    %cst_67 = arith.constant 0.000000e+00 : f32
    %128 = vector.broadcast %cst_67 : f32 to vector<8x1024xf32>
    %129 = arith.cmpf ogt, %127, %128 : vector<8x1024xf32>
    %cst_68 = arith.constant 5.000000e-02 : f32
    %130 = vector.broadcast %cst_68 : f32 to vector<8x1024xf32>
    %131 = arith.mulf %130, %127 : vector<8x1024xf32>
    %132 = arith.select %129, %127, %131 : vector<8x1024xi1>, vector<8x1024xf32>
    %133 = arith.addf %126, %132 : vector<8x1024xf32>
    %cst_69 = arith.constant 0.000000e+00 : f32
    %134 = vector.broadcast %cst_69 : f32 to vector<8x1024xf32>
    %135 = arith.cmpf ogt, %133, %134 : vector<8x1024xf32>
    %cst_70 = arith.constant 5.000000e-02 : f32
    %136 = vector.broadcast %cst_70 : f32 to vector<8x1024xf32>
    %137 = arith.mulf %136, %133 : vector<8x1024xf32>
    %138 = arith.select %135, %133, %137 : vector<8x1024xi1>, vector<8x1024xf32>
    %c0_71 = arith.constant 0 : index
    %c1_72 = arith.constant 1 : index
    %c0_73 = arith.constant 0 : index
    %c0_74 = arith.constant 0 : index
    %139 = vector.load %arg6[%c0_71, %c1_72, %c0_73, %c0_74] : memref<1x2x8x1024xf32, #tpu.memory_space<vmem>>, vector<1x1x8x1024xf32>
    %140 = vector.shape_cast %139 : vector<1x1x8x1024xf32> to vector<8x1024xf32>
    %141 = vector.shape_cast %138 : vector<8x1024xf32> to vector<1x1x8x1024xf32>
    tpu.vector_store %arg6[%c0_71, %c1_72, %c0_73, %c0_74], %141 {strides = array<i32>} : memref<1x2x8x1024xf32, #tpu.memory_space<vmem>>, vector<1x1x8x1024xf32>,
    return
  }
  func.func @transform_0(%arg0: i32) -> (i32, i32, i32) {
    %c0_i32 = arith.constant 0 : i32
    %c0_i32_0 = arith.constant 0 : i32
    %c0_i32_1 = arith.constant 0 : i32
    return %arg0, %c0_i32, %c0_i32_0 : i32, i32, i32
  }
  func.func @transform_1(%arg0: i32) -> (i32, i32) {
    %c0_i32 = arith.constant 0 : i32
    %c0_i32_0 = arith.constant 0 : i32
    %c0_i32_1 = arith.constant 0 : i32
    return %c0_i32, %c0_i32_0 : i32, i32
  }
  func.func @transform_2(%arg0: i32) -> (i32, i32) {
    %c0_i32 = arith.constant 0 : i32
    %c0_i32_0 = arith.constant 0 : i32
    %c0_i32_1 = arith.constant 0 : i32
    return %c0_i32, %c0_i32_0 : i32, i32
  }
  func.func @transform_3(%arg0: i32) -> (i32, i32) {
    %c0_i32 = arith.constant 0 : i32
    %c0_i32_0 = arith.constant 0 : i32
    %c0_i32_1 = arith.constant 0 : i32
    return %c0_i32, %c0_i32_0 : i32, i32
  }
  func.func @transform_4(%arg0: i32) -> (i32, i32) {
    %c0_i32 = arith.constant 0 : i32
    %c0_i32_0 = arith.constant 0 : i32
    %c0_i32_1 = arith.constant 0 : i32
    return %c0_i32, %c0_i32_0 : i32, i32
  }
  func.func @transform_5(%arg0: i32) -> (i32, i32, i32, i32) {
    %c0_i32 = arith.constant 0 : i32
    %c0_i32_0 = arith.constant 0 : i32
    %c0_i32_1 = arith.constant 0 : i32
    %c0_i32_2 = arith.constant 0 : i32
    return %arg0, %c0_i32, %c0_i32_0, %c0_i32_1 : i32, i32, i32, i32
  }
  func.func @transform_6(%arg0: i32) -> (i32, i32, i32, i32) {
    %c0_i32 = arith.constant 0 : i32
    %c0_i32_0 = arith.constant 0 : i32
    %c0_i32_1 = arith.constant 0 : i32
    %c0_i32_2 = arith.constant 0 : i32
    return %arg0, %c0_i32, %c0_i32_0, %c0_i32_1 : i32, i32, i32, i32
  }
}

</mosaic_0001>

<llo_original>
// kernel: tpu_custom_call.1
$region0: #{tpu_custom_call.1}
  #allocation0 [shape = 'u32[]', space=smem, size = 0x4, offset = 0x4, fixed_abs, tag = 'smem constant byte address 0x4 - core index']
  #allocation1 [shape = 'u32[72,128]{1,0:T(1,128)}', space=vmem, size = 0x9000, scoped, tag = 'internal scratch']
  %s0 = inlined_call_operand.vmem [shape: bf16[1,16,256], index: 0, kind: input, shape index: {}]
  %s1 = inlined_call_operand.hbm [shape: bf16[256,1024], index: 1, kind: input, shape index: {}]
  %s2 = inlined_call_operand.hbm [shape: f32[9,1024], index: 2, kind: input, shape index: {}]
  %s3 = inlined_call_operand.hbm [shape: bf16[16,72], index: 3, kind: input, shape index: {}]
  %s4 = inlined_call_operand.vmem [shape: f32[16,1], index: 4, kind: input, shape index: {}]
  %s5 = inlined_call_operand.hbm [shape: f32[1,2,8,1024], index: 5, kind: output, shape index: {0}]
  %s6 = inlined_call_operand.hbm [shape: f32[1,2,2,1024], index: 6, kind: output, shape index: {1}]
  %7 = xla_tuple %s5, %s6
  %s8 = sld [smem:[#allocation0]]
  $region50: #{tpu_custom_call.1} parent=0
    _
  %s10 = ssub.s32 1, %s8
  %s11 = scalar_select 0, %s10, %s8
  $region1: #{tpu_custom_call.1} parent=0
    #allocation2 [shape = 'u8[524288]{0}', space=vmem, size = 0x80000, scoped, tag = 'input window, operand 1, single buffered']
    #allocation3 [shape = 's32[1]{0}', space=sflag, size = 0x4, scoped, tag = 'scoped memory for tpu_custom_call.1']
    #allocation4 [shape = 's32[1]{0}', space=sflag, size = 0x4, scoped, tag = 'scoped memory for tpu_custom_call.1']
    #allocation5 [shape = 'u8[65536]{0}', space=vmem, size = 0x10000, scoped, tag = 'input window, operand 2, single buffered']
    #allocation6 [shape = 's32[1]{0}', space=sflag, size = 0x4, scoped, tag = 'scoped memory for tpu_custom_call.1']
    #allocation7 [shape = 'u8[4096]{0}', space=vmem, size = 0x1000, scoped, tag = 'input window, operand 3, single buffered']
    #allocation8 [shape = 'u8[65536]{0}', space=vmem, size = 0x10000, scoped, tag = 'output window, operand 0, single buffered']
    #allocation9 [shape = 'u8[16384]{0}', space=vmem, size = 0x4000, scoped, tag = 'output window, operand 1, single buffered']
    #allocation10 [shape = 's32[1]{0}', space=sflag, size = 0x4, scoped, tag = 'scoped memory for tpu_custom_call.1']
    %12 = vsyncpa [#allocation3], 0
    %13 = vsyncpa [#allocation6], 0
    %14 = vsyncpa [#allocation4], 0
    %15 = vsyncpa [#allocation10], 0
    // Predicated region
    $region2: #{tpu_custom_call.1} parent=1 // pred_check
      _
    $region3: #{tpu_custom_call.1} parent=1 // pred_check_branch
      %17 = sbr.rel (0) target = $region5
    $region4: #{tpu_custom_call.1} parent=1 // pred_region
      _
    $region5: #{tpu_custom_call.1} parent=1 // pred_fallthru
      _
    // Predicated region
    $region6: #{tpu_custom_call.1} parent=1 // pred_check
      _
    $region7: #{tpu_custom_call.1} parent=1 // pred_check_branch
      %19 = sbr.rel (0) target = $region9
    $region8: #{tpu_custom_call.1} parent=1 // pred_region
      %21 = vsyncadd [#allocation3], 0
      %s22 = sshll.u32 %s1, 4
      %s23 = int_to_ptr.hbm [resolvable:$true] %s22
      %s24 = sshll.u32 [#allocation2], 4
      %s25 = int_to_ptr.vmem [resolvable:$true] %s24
      %30 = dma.hbm_to_vmem [thread:$0]  %s23, 16384, %s25, [#allocation3], 512, 512, 32
    $region9: #{tpu_custom_call.1} parent=1 // pred_fallthru
      _
    // Predicated region
    $region10: #{tpu_custom_call.1} parent=1 // pred_check
      _
    $region11: #{tpu_custom_call.1} parent=1 // pred_check_branch
      %32 = sbr.rel (0) target = $region13
    $region12: #{tpu_custom_call.1} parent=1 // pred_region
      %34 = vsyncadd [#allocation6], 0
      %s35 = sshll.u32 %s2, 4
      %s36 = int_to_ptr.hbm [resolvable:$true] %s35
      %s37 = sshll.u32 [#allocation5], 4
      %s38 = int_to_ptr.vmem [resolvable:$true] %s37
      %43 = dma.hbm_to_vmem [thread:$0]  %s36, 2048, %s38, [#allocation6], 1024, 1024, 64
    $region13: #{tpu_custom_call.1} parent=1 // pred_fallthru
      _
    // Predicated region
    $region14: #{tpu_custom_call.1} parent=1 // pred_check
      _
    $region15: #{tpu_custom_call.1} parent=1 // pred_check_branch
      %45 = sbr.rel (0) target = $region17
    $region16: #{tpu_custom_call.1} parent=1 // pred_region
      %47 = vsyncadd [#allocation6], 0
      %s48 = sshll.u32 %s3, 4
      %s49 = int_to_ptr.hbm [resolvable:$true] %s48
      %s50 = sshll.u32 [#allocation7], 4
      %s51 = int_to_ptr.vmem [resolvable:$true] %s50
      %56 = dma.hbm_to_vmem [thread:$0]  %s49, 128, %s51, [#allocation6], 64, 64, 4
    $region17: #{tpu_custom_call.1} parent=1 // pred_fallthru
      _
    // Predicated region
    $region18: #{tpu_custom_call.1} parent=1 // pred_check
      _
    $region19: #{tpu_custom_call.1} parent=1 // pred_check_branch
      %58 = sbr.rel (0) target = $region21
    $region20: #{tpu_custom_call.1} parent=1 // pred_region
      _
    $region21: #{tpu_custom_call.1} parent=1 // pred_fallthru
      _
    // Predicated region
    $region22: #{tpu_custom_call.1} parent=1 // pred_check
      _
    $region23: #{tpu_custom_call.1} parent=1 // pred_check_branch
      %60 = sbr.rel (0) target = $region25
    $region24: #{tpu_custom_call.1} parent=1 // pred_region
      %62 = dma.done [#allocation3], 16384
    $region25: #{tpu_custom_call.1} parent=1 // pred_fallthru
      _
    // Predicated region
    $region26: #{tpu_custom_call.1} parent=1 // pred_check
      _
    $region27: #{tpu_custom_call.1} parent=1 // pred_check_branch
      %64 = sbr.rel (0) target = $region29
    $region28: #{tpu_custom_call.1} parent=1 // pred_region
      %66 = dma.done [#allocation6], 2048
    $region29: #{tpu_custom_call.1} parent=1 // pred_fallthru
      _
    // Predicated region
    $region30: #{tpu_custom_call.1} parent=1 // pred_check
      _
    $region31: #{tpu_custom_call.1} parent=1 // pred_check_branch
      %68 = sbr.rel (0) target = $region33
    $region32: #{tpu_custom_call.1} parent=1 // pred_region
      %70 = dma.done [#allocation6], 128
    $region33: #{tpu_custom_call.1} parent=1 // pred_fallthru
      _
    %v72 = vld [vmem:[%s0] sm:$0xff]
    %v73 = vld [vmem:[%s0 + $0x8] sm:$0xff]
    %v74 = vld [vmem:[#allocation2] sm:$0xff]
    %v75 = vld [vmem:[#allocation2 + $0x8] sm:$0xff]
    %v76 = vld [vmem:[#allocation2 + $0x10] sm:$0xff]
    %v77 = vld [vmem:[#allocation2 + $0x18] sm:$0xff]
    %v78 = vld [vmem:[#allocation2 + $0x20] sm:$0xff]
    %v79 = vld [vmem:[#allocation2 + $0x28] sm:$0xff]
    %v80 = vld [vmem:[#allocation2 + $0x30] sm:$0xff]
    %v81 = vld [vmem:[#allocation2 + $0x38] sm:$0xff]
    %v82 = vld [vmem:[#allocation2 + $0x40] sm:$0xff]
    %v83 = vld [vmem:[#allocation2 + $0x48] sm:$0xff]
    %v84 = vld [vmem:[#allocation2 + $0x50] sm:$0xff]
    %v85 = vld [vmem:[#allocation2 + $0x58] sm:$0xff]
    %v86 = vld [vmem:[#allocation2 + $0x60] sm:$0xff]
    %v87 = vld [vmem:[#allocation2 + $0x68] sm:$0xff]
    %v88 = vld [vmem:[#allocation2 + $0x70] sm:$0xff]
    %v89 = vld [vmem:[#allocation2 + $0x78] sm:$0xff]
    %v90 = vld [vmem:[#allocation2 + $0x80] sm:$0xff]
    %v91 = vld [vmem:[#allocation2 + $0x88] sm:$0xff]
    %v92 = vld [vmem:[#allocation2 + $0x90] sm:$0xff]
    %v93 = vld [vmem:[#allocation2 + $0x98] sm:$0xff]
    %v94 = vld [vmem:[#allocation2 + $0xa0] sm:$0xff]
    %v95 = vld [vmem:[#allocation2 + $0xa8] sm:$0xff]
    %v96 = vld [vmem:[#allocation2 + $0xb0] sm:$0xff]
    %v97 = vld [vmem:[#allocation2 + $0xb8] sm:$0xff]
    %v98 = vld [vmem:[#allocation2 + $0xc0] sm:$0xff]
    %v99 = vld [vmem:[#allocation2 + $0xc8] sm:$0xff]
    %v100 = vld [vmem:[#allocation2 + $0xd0] sm:$0xff]
    %v101 = vld [vmem:[#allocation2 + $0xd8] sm:$0xff]
    %v102 = vld [vmem:[#allocation2 + $0xe0] sm:$0xff]
    %v103 = vld [vmem:[#allocation2 + $0xe8] sm:$0xff]
    %v104 = vld [vmem:[#allocation2 + $0xf0] sm:$0xff]
    %v105 = vld [vmem:[#allocation2 + $0xf8] sm:$0xff]
    %v106 = vld [vmem:[#allocation2 + $0x100] sm:$0xff]
    %v107 = vld [vmem:[#allocation2 + $0x108] sm:$0xff]
    %v108 = vld [vmem:[#allocation2 + $0x110] sm:$0xff]
    %v109 = vld [vmem:[#allocation2 + $0x118] sm:$0xff]
    %v110 = vld [vmem:[#allocation2 + $0x120] sm:$0xff]
    %v111 = vld [vmem:[#allocation2 + $0x128] sm:$0xff]
    %v112 = vld [vmem:[#allocation2 + $0x130] sm:$0xff]
    %v113 = vld [vmem:[#allocation2 + $0x138] sm:$0xff]
    %v114 = vld [vmem:[#allocation2 + $0x140] sm:$0xff]
    %v115 = vld [vmem:[#allocation2 + $0x148] sm:$0xff]
    %v116 = vld [vmem:[#allocation2 + $0x150] sm:$0xff]
    %v117 = vld [vmem:[#allocation2 + $0x158] sm:$0xff]
    %v118 = vld [vmem:[#allocation2 + $0x160] sm:$0xff]
    %v119 = vld [vmem:[#allocation2 + $0x168] sm:$0xff]
    %v120 = vld [vmem:[#allocation2 + $0x170] sm:$0xff]
    %v121 = vld [vmem:[#allocation2 + $0x178] sm:$0xff]
    %v122 = vld [vmem:[#allocation2 + $0x180] sm:$0xff]
    %v123 = vld [vmem:[#allocation2 + $0x188] sm:$0xff]
    %v124 = vld [vmem:[#allocation2 + $0x190] sm:$0xff]
    %v125 = vld [vmem:[#allocation2 + $0x198] sm:$0xff]
    %v126 = vld [vmem:[#allocation2 + $0x1a0] sm:$0xff]
    %v127 = vld [vmem:[#allocation2 + $0x1a8] sm:$0xff]
    %v128 = vld [vmem:[#allocation2 + $0x1b0] sm:$0xff]
    %v129 = vld [vmem:[#allocation2 + $0x1b8] sm:$0xff]
    %v130 = vld [vmem:[#allocation2 + $0x1c0] sm:$0xff]
    %v131 = vld [vmem:[#allocation2 + $0x1c8] sm:$0xff]
    %v132 = vld [vmem:[#allocation2 + $0x1d0] sm:$0xff]
    %v133 = vld [vmem:[#allocation2 + $0x1d8] sm:$0xff]
    %v134 = vld [vmem:[#allocation2 + $0x1e0] sm:$0xff]
    %v135 = vld [vmem:[#allocation2 + $0x1e8] sm:$0xff]
    %v136 = vld [vmem:[#allocation2 + $0x1f0] sm:$0xff]
    %v137 = vld [vmem:[#allocation2 + $0x1f8] sm:$0xff]
    %v138 = vld [vmem:[#allocation2 + $0x200] sm:$0xff]
    %v139 = vld [vmem:[#allocation2 + $0x208] sm:$0xff]
    %v140 = vld [vmem:[#allocation2 + $0x210] sm:$0xff]
    %v141 = vld [vmem:[#allocation2 + $0x218] sm:$0xff]
    %v142 = vld [vmem:[#allocation2 + $0x220] sm:$0xff]
    %v143 = vld [vmem:[#allocation2 + $0x228] sm:$0xff]
    %v144 = vld [vmem:[#allocation2 + $0x230] sm:$0xff]
    %v145 = vld [vmem:[#allocation2 + $0x238] sm:$0xff]
    %v146 = vld [vmem:[#allocation2 + $0x240] sm:$0xff]
    %v147 = vld [vmem:[#allocation2 + $0x248] sm:$0xff]
    %v148 = vld [vmem:[#allocation2 + $0x250] sm:$0xff]
    %v149 = vld [vmem:[#allocation2 + $0x258] sm:$0xff]
    %v150 = vld [vmem:[#allocation2 + $0x260] sm:$0xff]
    %v151 = vld [vmem:[#allocation2 + $0x268] sm:$0xff]
    %v152 = vld [vmem:[#allocation2 + $0x270] sm:$0xff]
    %v153 = vld [vmem:[#allocation2 + $0x278] sm:$0xff]
    %v154 = vld [vmem:[#allocation2 + $0x280] sm:$0xff]
    %v155 = vld [vmem:[#allocation2 + $0x288] sm:$0xff]
    %v156 = vld [vmem:[#allocation2 + $0x290] sm:$0xff]
    %v157 = vld [vmem:[#allocation2 + $0x298] sm:$0xff]
    %v158 = vld [vmem:[#allocation2 + $0x2a0] sm:$0xff]
    %v159 = vld [vmem:[#allocation2 + $0x2a8] sm:$0xff]
    %v160 = vld [vmem:[#allocation2 + $0x2b0] sm:$0xff]
    %v161 = vld [vmem:[#allocation2 + $0x2b8] sm:$0xff]
    %v162 = vld [vmem:[#allocation2 + $0x2c0] sm:$0xff]
    %v163 = vld [vmem:[#allocation2 + $0x2c8] sm:$0xff]
    %v164 = vld [vmem:[#allocation2 + $0x2d0] sm:$0xff]
    %v165 = vld [vmem:[#allocation2 + $0x2d8] sm:$0xff]
    %v166 = vld [vmem:[#allocation2 + $0x2e0] sm:$0xff]
    %v167 = vld [vmem:[#allocation2 + $0x2e8] sm:$0xff]
    %v168 = vld [vmem:[#allocation2 + $0x2f0] sm:$0xff]
    %v169 = vld [vmem:[#allocation2 + $0x2f8] sm:$0xff]
    %v170 = vld [vmem:[#allocation2 + $0x300] sm:$0xff]
    %v171 = vld [vmem:[#allocation2 + $0x308] sm:$0xff]
    %v172 = vld [vmem:[#allocation2 + $0x310] sm:$0xff]
    %v173 = vld [vmem:[#allocation2 + $0x318] sm:$0xff]
    %v174 = vld [vmem:[#allocation2 + $0x320] sm:$0xff]
    %v175 = vld [vmem:[#allocation2 + $0x328] sm:$0xff]
    %v176 = vld [vmem:[#allocation2 + $0x330] sm:$0xff]
    %v177 = vld [vmem:[#allocation2 + $0x338] sm:$0xff]
    %v178 = vld [vmem:[#allocation2 + $0x340] sm:$0xff]
    %v179 = vld [vmem:[#allocation2 + $0x348] sm:$0xff]
    %v180 = vld [vmem:[#allocation2 + $0x350] sm:$0xff]
    %v181 = vld [vmem:[#allocation2 + $0x358] sm:$0xff]
    %v182 = vld [vmem:[#allocation2 + $0x360] sm:$0xff]
    %v183 = vld [vmem:[#allocation2 + $0x368] sm:$0xff]
    %v184 = vld [vmem:[#allocation2 + $0x370] sm:$0xff]
    %v185 = vld [vmem:[#allocation2 + $0x378] sm:$0xff]
    %v186 = vld [vmem:[#allocation2 + $0x380] sm:$0xff]
    %v187 = vld [vmem:[#allocation2 + $0x388] sm:$0xff]
    %v188 = vld [vmem:[#allocation2 + $0x390] sm:$0xff]
    %v189 = vld [vmem:[#allocation2 + $0x398] sm:$0xff]
    %v190 = vld [vmem:[#allocation2 + $0x3a0] sm:$0xff]
    %v191 = vld [vmem:[#allocation2 + $0x3a8] sm:$0xff]
    %v192 = vld [vmem:[#allocation2 + $0x3b0] sm:$0xff]
    %v193 = vld [vmem:[#allocation2 + $0x3b8] sm:$0xff]
    %v194 = vld [vmem:[#allocation2 + $0x3c0] sm:$0xff]
    %v195 = vld [vmem:[#allocation2 + $0x3c8] sm:$0xff]
    %v196 = vld [vmem:[#allocation2 + $0x3d0] sm:$0xff]
    %v197 = vld [vmem:[#allocation2 + $0x3d8] sm:$0xff]
    %v198 = vld [vmem:[#allocation2 + $0x3e0] sm:$0xff]
    %v199 = vld [vmem:[#allocation2 + $0x3e8] sm:$0xff]
    %v200 = vld [vmem:[#allocation2 + $0x3f0] sm:$0xff]
    %v201 = vld [vmem:[#allocation2 + $0x3f8] sm:$0xff]
    %v204 = vunpack.c.l.b16 %v72
    %v205 = vunpack.c.h.b16 %v72
    %v206 = vunpack.c.l.b16 %v73
    %v207 = vunpack.c.h.b16 %v73
    %v208 = vpack.c.b16 %v206, %v204
    %v209 = vpack.c.b16 %v207, %v205
    %v340 = vunpack.c.l.b16 %v74
    %v341 = vunpack.c.h.b16 %v74
    %v342 = vunpack.c.l.b16 %v75
    %v343 = vunpack.c.h.b16 %v75
    %v344 = vunpack.c.l.b16 %v76
    %v345 = vunpack.c.h.b16 %v76
    %v346 = vunpack.c.l.b16 %v77
    %v347 = vunpack.c.h.b16 %v77
    %v348 = vunpack.c.l.b16 %v78
    %v349 = vunpack.c.h.b16 %v78
    %v350 = vunpack.c.l.b16 %v79
    %v351 = vunpack.c.h.b16 %v79
    %v352 = vunpack.c.l.b16 %v80
    %v353 = vunpack.c.h.b16 %v80
    %v354 = vunpack.c.l.b16 %v81
    %v355 = vunpack.c.h.b16 %v81
    %v356 = vunpack.c.l.b16 %v82
    %v357 = vunpack.c.h.b16 %v82
    %v358 = vunpack.c.l.b16 %v83
    %v359 = vunpack.c.h.b16 %v83
    %v360 = vunpack.c.l.b16 %v84
    %v361 = vunpack.c.h.b16 %v84
    %v362 = vunpack.c.l.b16 %v85
    %v363 = vunpack.c.h.b16 %v85
    %v364 = vunpack.c.l.b16 %v86
    %v365 = vunpack.c.h.b16 %v86
    %v366 = vunpack.c.l.b16 %v87
    %v367 = vunpack.c.h.b16 %v87
    %v368 = vunpack.c.l.b16 %v88
    %v369 = vunpack.c.h.b16 %v88
    %v370 = vunpack.c.l.b16 %v89
    %v371 = vunpack.c.h.b16 %v89
    %v372 = vunpack.c.l.b16 %v90
    %v373 = vunpack.c.h.b16 %v90
    %v374 = vunpack.c.l.b16 %v91
    %v375 = vunpack.c.h.b16 %v91
    %v376 = vunpack.c.l.b16 %v92
    %v377 = vunpack.c.h.b16 %v92
    %v378 = vunpack.c.l.b16 %v93
    %v379 = vunpack.c.h.b16 %v93
    %v380 = vunpack.c.l.b16 %v94
    %v381 = vunpack.c.h.b16 %v94
    %v382 = vunpack.c.l.b16 %v95
    %v383 = vunpack.c.h.b16 %v95
    %v384 = vunpack.c.l.b16 %v96
    %v385 = vunpack.c.h.b16 %v96
    %v386 = vunpack.c.l.b16 %v97
    %v387 = vunpack.c.h.b16 %v97
    %v388 = vunpack.c.l.b16 %v98
    %v389 = vunpack.c.h.b16 %v98
    %v390 = vunpack.c.l.b16 %v99
    %v391 = vunpack.c.h.b16 %v99
    %v392 = vunpack.c.l.b16 %v100
    %v393 = vunpack.c.h.b16 %v100
    %v394 = vunpack.c.l.b16 %v101
    %v395 = vunpack.c.h.b16 %v101
    %v396 = vunpack.c.l.b16 %v102
    %v397 = vunpack.c.h.b16 %v102
    %v398 = vunpack.c.l.b16 %v103
    %v399 = vunpack.c.h.b16 %v103
    %v400 = vunpack.c.l.b16 %v104
    %v401 = vunpack.c.h.b16 %v104
    %v402 = vunpack.c.l.b16 %v105
    %v403 = vunpack.c.h.b16 %v105
    %v404 = vunpack.c.l.b16 %v106
    %v405 = vunpack.c.h.b16 %v106
    %v406 = vunpack.c.l.b16 %v107
    %v407 = vunpack.c.h.b16 %v107
    %v408 = vunpack.c.l.b16 %v108
    %v409 = vunpack.c.h.b16 %v108
    %v410 = vunpack.c.l.b16 %v109
    %v411 = vunpack.c.h.b16 %v109
    %v412 = vunpack.c.l.b16 %v110
    %v413 = vunpack.c.h.b16 %v110
    %v414 = vunpack.c.l.b16 %v111
    %v415 = vunpack.c.h.b16 %v111
    %v416 = vunpack.c.l.b16 %v112
    %v417 = vunpack.c.h.b16 %v112
    %v418 = vunpack.c.l.b16 %v113
    %v419 = vunpack.c.h.b16 %v113
    %v420 = vunpack.c.l.b16 %v114
    %v421 = vunpack.c.h.b16 %v114
    %v422 = vunpack.c.l.b16 %v115
    %v423 = vunpack.c.h.b16 %v115
    %v424 = vunpack.c.l.b16 %v116
    %v425 = vunpack.c.h.b16 %v116
    %v426 = vunpack.c.l.b16 %v117
    %v427 = vunpack.c.h.b16 %v117
    %v428 = vunpack.c.l.b16 %v118
    %v429 = vunpack.c.h.b16 %v118
    %v430 = vunpack.c.l.b16 %v119
    %v431 = vunpack.c.h.b16 %v119
    %v432 = vunpack.c.l.b16 %v120
    %v433 = vunpack.c.h.b16 %v120
    %v434 = vunpack.c.l.b16 %v121
    %v435 = vunpack.c.h.b16 %v121
    %v436 = vunpack.c.l.b16 %v122
    %v437 = vunpack.c.h.b16 %v122
    %v438 = vunpack.c.l.b16 %v123
    %v439 = vunpack.c.h.b16 %v123
    %v440 = vunpack.c.l.b16 %v124
    %v441 = vunpack.c.h.b16 %v124
    %v442 = vunpack.c.l.b16 %v125
    %v443 = vunpack.c.h.b16 %v125
    %v444 = vunpack.c.l.b16 %v126
    %v445 = vunpack.c.h.b16 %v126
    %v446 = vunpack.c.l.b16 %v127
    %v447 = vunpack.c.h.b16 %v127
    %v448 = vunpack.c.l.b16 %v128
    %v449 = vunpack.c.h.b16 %v128
    %v450 = vunpack.c.l.b16 %v129
    %v451 = vunpack.c.h.b16 %v129
    %v452 = vunpack.c.l.b16 %v130
    %v453 = vunpack.c.h.b16 %v130
    %v454 = vunpack.c.l.b16 %v131
    %v455 = vunpack.c.h.b16 %v131
    %v456 = vunpack.c.l.b16 %v132
    %v457 = vunpack.c.h.b16 %v132
    %v458 = vunpack.c.l.b16 %v133
    %v459 = vunpack.c.h.b16 %v133
    %v460 = vunpack.c.l.b16 %v134
    %v461 = vunpack.c.h.b16 %v134
    %v462 = vunpack.c.l.b16 %v135
    %v463 = vunpack.c.h.b16 %v135
    %v464 = vunpack.c.l.b16 %v136
    %v465 = vunpack.c.h.b16 %v136
    %v466 = vunpack.c.l.b16 %v137
    %v467 = vunpack.c.h.b16 %v137
    %v468 = vunpack.c.l.b16 %v138
    %v469 = vunpack.c.h.b16 %v138
    %v470 = vunpack.c.l.b16 %v139
    %v471 = vunpack.c.h.b16 %v139
    %v472 = vunpack.c.l.b16 %v140
    %v473 = vunpack.c.h.b16 %v140
    %v474 = vunpack.c.l.b16 %v141
    %v475 = vunpack.c.h.b16 %v141
    %v476 = vunpack.c.l.b16 %v142
    %v477 = vunpack.c.h.b16 %v142
    %v478 = vunpack.c.l.b16 %v143
    %v479 = vunpack.c.h.b16 %v143
    %v480 = vunpack.c.l.b16 %v144
    %v481 = vunpack.c.h.b16 %v144
    %v482 = vunpack.c.l.b16 %v145
    %v483 = vunpack.c.h.b16 %v145
    %v484 = vunpack.c.l.b16 %v146
    %v485 = vunpack.c.h.b16 %v146
    %v486 = vunpack.c.l.b16 %v147
    %v487 = vunpack.c.h.b16 %v147
    %v488 = vunpack.c.l.b16 %v148
    %v489 = vunpack.c.h.b16 %v148
    %v490 = vunpack.c.l.b16 %v149
    %v491 = vunpack.c.h.b16 %v149
    %v492 = vunpack.c.l.b16 %v150
    %v493 = vunpack.c.h.b16 %v150
    %v494 = vunpack.c.l.b16 %v151
    %v495 = vunpack.c.h.b16 %v151
    %v496 = vunpack.c.l.b16 %v152
    %v497 = vunpack.c.h.b16 %v152
    %v498 = vunpack.c.l.b16 %v153
    %v499 = vunpack.c.h.b16 %v153
    %v500 = vunpack.c.l.b16 %v154
    %v501 = vunpack.c.h.b16 %v154
    %v502 = vunpack.c.l.b16 %v155
    %v503 = vunpack.c.h.b16 %v155
    %v504 = vunpack.c.l.b16 %v156
    %v505 = vunpack.c.h.b16 %v156
    %v506 = vunpack.c.l.b16 %v157
    %v507 = vunpack.c.h.b16 %v157
    %v508 = vunpack.c.l.b16 %v158
    %v509 = vunpack.c.h.b16 %v158
    %v510 = vunpack.c.l.b16 %v159
    %v511 = vunpack.c.h.b16 %v159
    %v512 = vunpack.c.l.b16 %v160
    %v513 = vunpack.c.h.b16 %v160
    %v514 = vunpack.c.l.b16 %v161
    %v515 = vunpack.c.h.b16 %v161
    %v516 = vunpack.c.l.b16 %v162
    %v517 = vunpack.c.h.b16 %v162
    %v518 = vunpack.c.l.b16 %v163
    %v519 = vunpack.c.h.b16 %v163
    %v520 = vunpack.c.l.b16 %v164
    %v521 = vunpack.c.h.b16 %v164
    %v522 = vunpack.c.l.b16 %v165
    %v523 = vunpack.c.h.b16 %v165
    %v524 = vunpack.c.l.b16 %v166
    %v525 = vunpack.c.h.b16 %v166
    %v526 = vunpack.c.l.b16 %v167
    %v527 = vunpack.c.h.b16 %v167
    %v528 = vunpack.c.l.b16 %v168
    %v529 = vunpack.c.h.b16 %v168
    %v530 = vunpack.c.l.b16 %v169
    %v531 = vunpack.c.h.b16 %v169
    %v532 = vunpack.c.l.b16 %v170
    %v533 = vunpack.c.h.b16 %v170
    %v534 = vunpack.c.l.b16 %v171
    %v535 = vunpack.c.h.b16 %v171
    %v536 = vunpack.c.l.b16 %v172
    %v537 = vunpack.c.h.b16 %v172
    %v538 = vunpack.c.l.b16 %v173
    %v539 = vunpack.c.h.b16 %v173
    %v540 = vunpack.c.l.b16 %v174
    %v541 = vunpack.c.h.b16 %v174
    %v542 = vunpack.c.l.b16 %v175
    %v543 = vunpack.c.h.b16 %v175
    %v544 = vunpack.c.l.b16 %v176
    %v545 = vunpack.c.h.b16 %v176
    %v546 = vunpack.c.l.b16 %v177
    %v547 = vunpack.c.h.b16 %v177
    %v548 = vunpack.c.l.b16 %v178
    %v549 = vunpack.c.h.b16 %v178
    %v550 = vunpack.c.l.b16 %v179
    %v551 = vunpack.c.h.b16 %v179
    %v552 = vunpack.c.l.b16 %v180
    %v553 = vunpack.c.h.b16 %v180
    %v554 = vunpack.c.l.b16 %v181
    %v555 = vunpack.c.h.b16 %v181
    %v556 = vunpack.c.l.b16 %v182
    %v557 = vunpack.c.h.b16 %v182
    %v558 = vunpack.c.l.b16 %v183
    %v559 = vunpack.c.h.b16 %v183
    %v560 = vunpack.c.l.b16 %v184
    %v561 = vunpack.c.h.b16 %v184
    %v562 = vunpack.c.l.b16 %v185
    %v563 = vunpack.c.h.b16 %v185
    %v564 = vunpack.c.l.b16 %v186
    %v565 = vunpack.c.h.b16 %v186
    %v566 = vunpack.c.l.b16 %v187
    %v567 = vunpack.c.h.b16 %v187
    %v568 = vunpack.c.l.b16 %v188
    %v569 = vunpack.c.h.b16 %v188
    %v570 = vunpack.c.l.b16 %v189
    %v571 = vunpack.c.h.b16 %v189
    %v572 = vunpack.c.l.b16 %v190
    %v573 = vunpack.c.h.b16 %v190
    %v574 = vunpack.c.l.b16 %v191
    %v575 = vunpack.c.h.b16 %v191
    %v576 = vunpack.c.l.b16 %v192
    %v577 = vunpack.c.h.b16 %v192
    %v578 = vunpack.c.l.b16 %v193
    %v579 = vunpack.c.h.b16 %v193
    %v580 = vunpack.c.l.b16 %v194
    %v581 = vunpack.c.h.b16 %v194
    %v582 = vunpack.c.l.b16 %v195
    %v583 = vunpack.c.h.b16 %v195
    %v584 = vunpack.c.l.b16 %v196
    %v585 = vunpack.c.h.b16 %v196
    %v586 = vunpack.c.l.b16 %v197
    %v587 = vunpack.c.h.b16 %v197
    %v588 = vunpack.c.l.b16 %v198
    %v589 = vunpack.c.h.b16 %v198
    %v590 = vunpack.c.l.b16 %v199
    %v591 = vunpack.c.h.b16 %v199
    %v592 = vunpack.c.l.b16 %v200
    %v593 = vunpack.c.h.b16 %v200
    %v594 = vunpack.c.l.b16 %v201
    %v595 = vunpack.c.h.b16 %v201
    %v596 = vpack.c.b16 %v348, %v340
    %v597 = vpack.c.b16 %v349, %v341
    %v598 = vpack.c.b16 %v350, %v342
    %v599 = vpack.c.b16 %v351, %v343
    %v600 = vpack.c.b16 %v352, %v344
    %v601 = vpack.c.b16 %v353, %v345
    %v602 = vpack.c.b16 %v354, %v346
    %v603 = vpack.c.b16 %v355, %v347
    %v604 = vpack.c.b16 %v364, %v356
    %v605 = vpack.c.b16 %v365, %v357
    %v606 = vpack.c.b16 %v366, %v358
    %v607 = vpack.c.b16 %v367, %v359
    %v608 = vpack.c.b16 %v368, %v360
    %v609 = vpack.c.b16 %v369, %v361
    %v610 = vpack.c.b16 %v370, %v362
    %v611 = vpack.c.b16 %v371, %v363
    %v612 = vpack.c.b16 %v380, %v372
    %v613 = vpack.c.b16 %v381, %v373
    %v614 = vpack.c.b16 %v382, %v374
    %v615 = vpack.c.b16 %v383, %v375
    %v616 = vpack.c.b16 %v384, %v376
    %v617 = vpack.c.b16 %v385, %v377
    %v618 = vpack.c.b16 %v386, %v378
    %v619 = vpack.c.b16 %v387, %v379
    %v620 = vpack.c.b16 %v396, %v388
    %v621 = vpack.c.b16 %v397, %v389
    %v622 = vpack.c.b16 %v398, %v390
    %v623 = vpack.c.b16 %v399, %v391
    %v624 = vpack.c.b16 %v400, %v392
    %v625 = vpack.c.b16 %v401, %v393
    %v626 = vpack.c.b16 %v402, %v394
    %v627 = vpack.c.b16 %v403, %v395
    %v628 = vpack.c.b16 %v412, %v404
    %v629 = vpack.c.b16 %v413, %v405
    %v630 = vpack.c.b16 %v414, %v406
    %v631 = vpack.c.b16 %v415, %v407
    %v632 = vpack.c.b16 %v416, %v408
    %v633 = vpack.c.b16 %v417, %v409
    %v634 = vpack.c.b16 %v418, %v410
    %v635 = vpack.c.b16 %v419, %v411
    %v636 = vpack.c.b16 %v428, %v420
    %v637 = vpack.c.b16 %v429, %v421
    %v638 = vpack.c.b16 %v430, %v422
    %v639 = vpack.c.b16 %v431, %v423
    %v640 = vpack.c.b16 %v432, %v424
    %v641 = vpack.c.b16 %v433, %v425
    %v642 = vpack.c.b16 %v434, %v426
    %v643 = vpack.c.b16 %v435, %v427
    %v644 = vpack.c.b16 %v444, %v436
    %v645 = vpack.c.b16 %v445, %v437
    %v646 = vpack.c.b16 %v446, %v438
    %v647 = vpack.c.b16 %v447, %v439
    %v648 = vpack.c.b16 %v448, %v440
    %v649 = vpack.c.b16 %v449, %v441
    %v650 = vpack.c.b16 %v450, %v442
    %v651 = vpack.c.b16 %v451, %v443
    %v652 = vpack.c.b16 %v460, %v452
    %v653 = vpack.c.b16 %v461, %v453
    %v654 = vpack.c.b16 %v462, %v454
    %v655 = vpack.c.b16 %v463, %v455
    %v656 = vpack.c.b16 %v464, %v456
    %v657 = vpack.c.b16 %v465, %v457
    %v658 = vpack.c.b16 %v466, %v458
    %v659 = vpack.c.b16 %v467, %v459
    %v660 = vpack.c.b16 %v476, %v468
    %v661 = vpack.c.b16 %v477, %v469
    %v662 = vpack.c.b16 %v478, %v470
    %v663 = vpack.c.b16 %v479, %v471
    %v664 = vpack.c.b16 %v480, %v472
    %v665 = vpack.c.b16 %v481, %v473
    %v666 = vpack.c.b16 %v482, %v474
    %v667 = vpack.c.b16 %v483, %v475
    %v668 = vpack.c.b16 %v492, %v484
    %v669 = vpack.c.b16 %v493, %v485
    %v670 = vpack.c.b16 %v494, %v486
    %v671 = vpack.c.b16 %v495, %v487
    %v672 = vpack.c.b16 %v496, %v488
    %v673 = vpack.c.b16 %v497, %v489
    %v674 = vpack.c.b16 %v498, %v490
    %v675 = vpack.c.b16 %v499, %v491
    %v676 = vpack.c.b16 %v508, %v500
    %v677 = vpack.c.b16 %v509, %v501
    %v678 = vpack.c.b16 %v510, %v502
    %v679 = vpack.c.b16 %v511, %v503
    %v680 = vpack.c.b16 %v512, %v504
    %v681 = vpack.c.b16 %v513, %v505
    %v682 = vpack.c.b16 %v514, %v506
    %v683 = vpack.c.b16 %v515, %v507
    %v684 = vpack.c.b16 %v524, %v516
    %v685 = vpack.c.b16 %v525, %v517
    %v686 = vpack.c.b16 %v526, %v518
    %v687 = vpack.c.b16 %v527, %v519
    %v688 = vpack.c.b16 %v528, %v520
    %v689 = vpack.c.b16 %v529, %v521
    %v690 = vpack.c.b16 %v530, %v522
    %v691 = vpack.c.b16 %v531, %v523
    %v692 = vpack.c.b16 %v540, %v532
    %v693 = vpack.c.b16 %v541, %v533
    %v694 = vpack.c.b16 %v542, %v534
    %v695 = vpack.c.b16 %v543, %v535
    %v696 = vpack.c.b16 %v544, %v536
    %v697 = vpack.c.b16 %v545, %v537
    %v698 = vpack.c.b16 %v546, %v538
    %v699 = vpack.c.b16 %v547, %v539
    %v700 = vpack.c.b16 %v556, %v548
    %v701 = vpack.c.b16 %v557, %v549
    %v702 = vpack.c.b16 %v558, %v550
    %v703 = vpack.c.b16 %v559, %v551
    %v704 = vpack.c.b16 %v560, %v552
    %v705 = vpack.c.b16 %v561, %v553
    %v706 = vpack.c.b16 %v562, %v554
    %v707 = vpack.c.b16 %v563, %v555
    %v708 = vpack.c.b16 %v572, %v564
    %v709 = vpack.c.b16 %v573, %v565
    %v710 = vpack.c.b16 %v574, %v566
    %v711 = vpack.c.b16 %v575, %v567
    %v712 = vpack.c.b16 %v576, %v568
    %v713 = vpack.c.b16 %v577, %v569
    %v714 = vpack.c.b16 %v578, %v570
    %v715 = vpack.c.b16 %v579, %v571
    %v716 = vpack.c.b16 %v588, %v580
    %v717 = vpack.c.b16 %v589, %v581
    %v718 = vpack.c.b16 %v590, %v582
    %v719 = vpack.c.b16 %v591, %v583
    %v720 = vpack.c.b16 %v592, %v584
    %v721 = vpack.c.b16 %v593, %v585
    %v722 = vpack.c.b16 %v594, %v586
    %v723 = vpack.c.b16 %v595, %v587
    %852 = vmatpush.bf16.msra.mxu0 %v652
    %853 = vmatpush.bf16.msra.mxu0 %v644
    %854 = vmatpush.bf16.msra.mxu0 %v636
    %855 = vmatpush.bf16.msra.mxu0 %v628
    %856 = vmatpush.bf16.msra.mxu0 %v620
    %857 = vmatpush.bf16.msra.mxu0 %v612
    %858 = vmatpush.bf16.msra.mxu0 %v604
    %859 = vmatpush.bf16.msra.mxu0 %v596
    %860 = vmatmul.bf16.gmra.mxu0 %v208
    %v861 = vpop.f32.mrf.mxu0
    %v862 = vadd.f32 0.0, %v861
    %v863 = vpop.f32.mrf.mxu0
    %v864 = vadd.f32 0.0, %v863
    %865 = vdwg.mxu0
    %866 = vmatpush.bf16.msra.mxu0 %v716
    %867 = vmatpush.bf16.msra.mxu0 %v708
    %868 = vmatpush.bf16.msra.mxu0 %v700
    %869 = vmatpush.bf16.msra.mxu0 %v692
    %870 = vmatpush.bf16.msra.mxu0 %v684
    %871 = vmatpush.bf16.msra.mxu0 %v676
    %872 = vmatpush.bf16.msra.mxu0 %v668
    %873 = vmatpush.bf16.msra.mxu0 %v660
    %874 = vmatmul.bf16.gmra.mxu0 %v209
    %v875 = vpop.f32.mrf.mxu0
    %v876 = vadd.f32 %v862, %v875
    %v877 = vpop.f32.mrf.mxu0
    %v878 = vadd.f32 %v864, %v877
    %879 = vdwg.mxu0
    %880 = vmatpush.bf16.msra.mxu0 %v653
    %881 = vmatpush.bf16.msra.mxu0 %v645
    %882 = vmatpush.bf16.msra.mxu0 %v637
    %883 = vmatpush.bf16.msra.mxu0 %v629
    %884 = vmatpush.bf16.msra.mxu0 %v621
    %885 = vmatpush.bf16.msra.mxu0 %v613
    %886 = vmatpush.bf16.msra.mxu0 %v605
    %887 = vmatpush.bf16.msra.mxu0 %v597
    %888 = vmatmul.bf16.gmra.mxu0 %v208
    %v889 = vpop.f32.mrf.mxu0
    %v890 = vadd.f32 0.0, %v889
    %v891 = vpop.f32.mrf.mxu0
    %v892 = vadd.f32 0.0, %v891
    %893 = vdwg.mxu0
    %894 = vmatpush.bf16.msra.mxu0 %v717
    %895 = vmatpush.bf16.msra.mxu0 %v709
    %896 = vmatpush.bf16.msra.mxu0 %v701
    %897 = vmatpush.bf16.msra.mxu0 %v693
    %898 = vmatpush.bf16.msra.mxu0 %v685
    %899 = vmatpush.bf16.msra.mxu0 %v677
    %900 = vmatpush.bf16.msra.mxu0 %v669
    %901 = vmatpush.bf16.msra.mxu0 %v661
    %902 = vmatmul.bf16.gmra.mxu0 %v209
    %v903 = vpop.f32.mrf.mxu0
    %v904 = vadd.f32 %v890, %v903
    %v905 = vpop.f32.mrf.mxu0
    %v906 = vadd.f32 %v892, %v905
    %907 = vdwg.mxu0
    %908 = vmatpush.bf16.msra.mxu0 %v654
    %909 = vmatpush.bf16.msra.mxu0 %v646
    %910 = vmatpush.bf16.msra.mxu0 %v638
    %911 = vmatpush.bf16.msra.mxu0 %v630
    %912 = vmatpush.bf16.msra.mxu0 %v622
    %913 = vmatpush.bf16.msra.mxu0 %v614
    %914 = vmatpush.bf16.msra.mxu0 %v606
    %915 = vmatpush.bf16.msra.mxu0 %v598
    %916 = vmatmul.bf16.gmra.mxu0 %v208
    %v917 = vpop.f32.mrf.mxu0
    %v918 = vadd.f32 0.0, %v917
    %v919 = vpop.f32.mrf.mxu0
    %v920 = vadd.f32 0.0, %v919
    %921 = vdwg.mxu0
    %922 = vmatpush.bf16.msra.mxu0 %v718
    %923 = vmatpush.bf16.msra.mxu0 %v710
    %924 = vmatpush.bf16.msra.mxu0 %v702
    %925 = vmatpush.bf16.msra.mxu0 %v694
    %926 = vmatpush.bf16.msra.mxu0 %v686
    %927 = vmatpush.bf16.msra.mxu0 %v678
    %928 = vmatpush.bf16.msra.mxu0 %v670
    %929 = vmatpush.bf16.msra.mxu0 %v662
    %930 = vmatmul.bf16.gmra.mxu0 %v209
    %v931 = vpop.f32.mrf.mxu0
    %v932 = vadd.f32 %v918, %v931
    %v933 = vpop.f32.mrf.mxu0
    %v934 = vadd.f32 %v920, %v933
    %935 = vdwg.mxu0
    %936 = vmatpush.bf16.msra.mxu0 %v655
    %937 = vmatpush.bf16.msra.mxu0 %v647
    %938 = vmatpush.bf16.msra.mxu0 %v639
    %939 = vmatpush.bf16.msra.mxu0 %v631
    %940 = vmatpush.bf16.msra.mxu0 %v623
    %941 = vmatpush.bf16.msra.mxu0 %v615
    %942 = vmatpush.bf16.msra.mxu0 %v607
    %943 = vmatpush.bf16.msra.mxu0 %v599
    %944 = vmatmul.bf16.gmra.mxu0 %v208
    %v945 = vpop.f32.mrf.mxu0
    %v946 = vadd.f32 0.0, %v945
    %v947 = vpop.f32.mrf.mxu0
    %v948 = vadd.f32 0.0, %v947
    %949 = vdwg.mxu0
    %950 = vmatpush.bf16.msra.mxu0 %v719
    %951 = vmatpush.bf16.msra.mxu0 %v711
    %952 = vmatpush.bf16.msra.mxu0 %v703
    %953 = vmatpush.bf16.msra.mxu0 %v695
    %954 = vmatpush.bf16.msra.mxu0 %v687
    %955 = vmatpush.bf16.msra.mxu0 %v679
    %956 = vmatpush.bf16.msra.mxu0 %v671
    %957 = vmatpush.bf16.msra.mxu0 %v663
    %958 = vmatmul.bf16.gmra.mxu0 %v209
    %v959 = vpop.f32.mrf.mxu0
    %v960 = vadd.f32 %v946, %v959
    %v961 = vpop.f32.mrf.mxu0
    %v962 = vadd.f32 %v948, %v961
    %963 = vdwg.mxu0
    %964 = vmatpush.bf16.msra.mxu0 %v656
    %965 = vmatpush.bf16.msra.mxu0 %v648
    %966 = vmatpush.bf16.msra.mxu0 %v640
    %967 = vmatpush.bf16.msra.mxu0 %v632
    %968 = vmatpush.bf16.msra.mxu0 %v624
    %969 = vmatpush.bf16.msra.mxu0 %v616
    %970 = vmatpush.bf16.msra.mxu0 %v608
    %971 = vmatpush.bf16.msra.mxu0 %v600
    %972 = vmatmul.bf16.gmra.mxu0 %v208
    %v973 = vpop.f32.mrf.mxu0
    %v974 = vadd.f32 0.0, %v973
    %v975 = vpop.f32.mrf.mxu0
    %v976 = vadd.f32 0.0, %v975
    %977 = vdwg.mxu0
    %978 = vmatpush.bf16.msra.mxu0 %v720
    %979 = vmatpush.bf16.msra.mxu0 %v712
    %980 = vmatpush.bf16.msra.mxu0 %v704
    %981 = vmatpush.bf16.msra.mxu0 %v696
    %982 = vmatpush.bf16.msra.mxu0 %v688
    %983 = vmatpush.bf16.msra.mxu0 %v680
    %984 = vmatpush.bf16.msra.mxu0 %v672
    %985 = vmatpush.bf16.msra.mxu0 %v664
    %986 = vmatmul.bf16.gmra.mxu0 %v209
    %v987 = vpop.f32.mrf.mxu0
    %v988 = vadd.f32 %v974, %v987
    %v989 = vpop.f32.mrf.mxu0
    %v990 = vadd.f32 %v976, %v989
    %991 = vdwg.mxu0
    %992 = vmatpush.bf16.msra.mxu0 %v657
    %993 = vmatpush.bf16.msra.mxu0 %v649
    %994 = vmatpush.bf16.msra.mxu0 %v641
    %995 = vmatpush.bf16.msra.mxu0 %v633
    %996 = vmatpush.bf16.msra.mxu0 %v625
    %997 = vmatpush.bf16.msra.mxu0 %v617
    %998 = vmatpush.bf16.msra.mxu0 %v609
    %999 = vmatpush.bf16.msra.mxu0 %v601
    %1000 = vmatmul.bf16.gmra.mxu0 %v208
    %v1001 = vpop.f32.mrf.mxu0
    %v1002 = vadd.f32 0.0, %v1001
    %v1003 = vpop.f32.mrf.mxu0
    %v1004 = vadd.f32 0.0, %v1003
    %1005 = vdwg.mxu0
    %1006 = vmatpush.bf16.msra.mxu0 %v721
    %1007 = vmatpush.bf16.msra.mxu0 %v713
    %1008 = vmatpush.bf16.msra.mxu0 %v705
    %1009 = vmatpush.bf16.msra.mxu0 %v697
    %1010 = vmatpush.bf16.msra.mxu0 %v689
    %1011 = vmatpush.bf16.msra.mxu0 %v681
    %1012 = vmatpush.bf16.msra.mxu0 %v673
    %1013 = vmatpush.bf16.msra.mxu0 %v665
    %1014 = vmatmul.bf16.gmra.mxu0 %v209
    %v1015 = vpop.f32.mrf.mxu0
    %v1016 = vadd.f32 %v1002, %v1015
    %v1017 = vpop.f32.mrf.mxu0
    %v1018 = vadd.f32 %v1004, %v1017
    %1019 = vdwg.mxu0
    %1020 = vmatpush.bf16.msra.mxu0 %v658
    %1021 = vmatpush.bf16.msra.mxu0 %v650
    %1022 = vmatpush.bf16.msra.mxu0 %v642
    %1023 = vmatpush.bf16.msra.mxu0 %v634
    %1024 = vmatpush.bf16.msra.mxu0 %v626
    %1025 = vmatpush.bf16.msra.mxu0 %v618
    %1026 = vmatpush.bf16.msra.mxu0 %v610
    %1027 = vmatpush.bf16.msra.mxu0 %v602
    %1028 = vmatmul.bf16.gmra.mxu0 %v208
    %v1029 = vpop.f32.mrf.mxu0
    %v1030 = vadd.f32 0.0, %v1029
    %v1031 = vpop.f32.mrf.mxu0
    %v1032 = vadd.f32 0.0, %v1031
    %1033 = vdwg.mxu0
    %1034 = vmatpush.bf16.msra.mxu0 %v722
    %1035 = vmatpush.bf16.msra.mxu0 %v714
    %1036 = vmatpush.bf16.msra.mxu0 %v706
    %1037 = vmatpush.bf16.msra.mxu0 %v698
    %1038 = vmatpush.bf16.msra.mxu0 %v690
    %1039 = vmatpush.bf16.msra.mxu0 %v682
    %1040 = vmatpush.bf16.msra.mxu0 %v674
    %1041 = vmatpush.bf16.msra.mxu0 %v666
    %1042 = vmatmul.bf16.gmra.mxu0 %v209
    %v1043 = vpop.f32.mrf.mxu0
    %v1044 = vadd.f32 %v1030, %v1043
    %v1045 = vpop.f32.mrf.mxu0
    %v1046 = vadd.f32 %v1032, %v1045
    %1047 = vdwg.mxu0
    %1048 = vmatpush.bf16.msra.mxu0 %v659
    %1049 = vmatpush.bf16.msra.mxu0 %v651
    %1050 = vmatpush.bf16.msra.mxu0 %v643
    %1051 = vmatpush.bf16.msra.mxu0 %v635
    %1052 = vmatpush.bf16.msra.mxu0 %v627
    %1053 = vmatpush.bf16.msra.mxu0 %v619
    %1054 = vmatpush.bf16.msra.mxu0 %v611
    %1055 = vmatpush.bf16.msra.mxu0 %v603
    %1056 = vmatmul.bf16.gmra.mxu0 %v208
    %v1057 = vpop.f32.mrf.mxu0
    %v1058 = vadd.f32 0.0, %v1057
    %v1059 = vpop.f32.mrf.mxu0
    %v1060 = vadd.f32 0.0, %v1059
    %1061 = vdwg.mxu0
    %1062 = vmatpush.bf16.msra.mxu0 %v723
    %1063 = vmatpush.bf16.msra.mxu0 %v715
    %1064 = vmatpush.bf16.msra.mxu0 %v707
    %1065 = vmatpush.bf16.msra.mxu0 %v699
    %1066 = vmatpush.bf16.msra.mxu0 %v691
    %1067 = vmatpush.bf16.msra.mxu0 %v683
    %1068 = vmatpush.bf16.msra.mxu0 %v675
    %1069 = vmatpush.bf16.msra.mxu0 %v667
    %1070 = vmatmul.bf16.gmra.mxu0 %v209
    %v1071 = vpop.f32.mrf.mxu0
    %v1072 = vadd.f32 %v1058, %v1071
    %v1073 = vpop.f32.mrf.mxu0
    %v1074 = vadd.f32 %v1060, %v1073
    %1075 = vdwg.mxu0
    %v1076 = vld [vmem:[#allocation7] sm:$0xf]
    %v1077 = vld [vmem:[#allocation7 + $0x4] sm:$0xf]
    %v1078 = vld [vmem:[%s4] sm:$0xff]
    %v1079 = vld [vmem:[%s4 + $0x8] sm:$0xff]
    %1088 = vst.sshfl [vmem:[#allocation1] sm:$0xff pattern:$0x73625140] %v876
    %1089 = vst.sshfl [vmem:[#allocation1 + $0x8] sm:$0xff pattern:$0x73625140] %v904
    %1090 = vst.sshfl [vmem:[#allocation1 + $0x10] sm:$0xff pattern:$0x73625140] %v932
    %1091 = vst.sshfl [vmem:[#allocation1 + $0x18] sm:$0xff pattern:$0x73625140] %v960
    %1092 = vst.sshfl [vmem:[#allocation1 + $0x20] sm:$0xff pattern:$0x73625140] %v988
    %1093 = vst.sshfl [vmem:[#allocation1 + $0x28] sm:$0xff pattern:$0x73625140] %v1016
    %1094 = vst.sshfl [vmem:[#allocation1 + $0x30] sm:$0xff pattern:$0x73625140] %v1044
    %1095 = vst.sshfl [vmem:[#allocation1 + $0x38] sm:$0xff pattern:$0x73625140] %v1072
    %s1096 = scalar_lea.vmem [#allocation1], 2
    %v1097 = vld [vmem:[%s1096] ss:$4 sm:$0xff]
    %s1098 = scalar_lea.vmem [#allocation1], 34
    %v1099 = vld [vmem:[%s1098] ss:$4 sm:$0xff]
    %1102 = vst [vmem:[#allocation9] sm:$0xff] %v1097
    %1103 = vst [vmem:[#allocation9 + $0x8] sm:$0xff] %v1099
    %1104 = vrot.lane.b32.xlu0 %v876, 33
    %v1105 = vpop.permute.xlu0 %1104
    %1106 = vrot.lane.b32.xlu0 %v904, 33
    %v1107 = vpop.permute.xlu0 %1106
    %1108 = vrot.lane.b32.xlu0 %v932, 33
    %v1109 = vpop.permute.xlu0 %1108
    %1110 = vrot.lane.b32.xlu0 %v960, 33
    %v1111 = vpop.permute.xlu0 %1110
    %1112 = vrot.lane.b32.xlu0 %v988, 33
    %v1113 = vpop.permute.xlu0 %1112
    %1114 = vrot.lane.b32.xlu0 %v1016, 33
    %v1115 = vpop.permute.xlu0 %1114
    %1116 = vrot.lane.b32.xlu0 %v1044, 33
    %v1117 = vpop.permute.xlu0 %1116
    %1118 = vrot.lane.b32.xlu0 %v1072, 33
    %v1119 = vpop.permute.xlu0 %1118
    %v1120 = vlaneseq
    %v1121 = vand.u32 %v1120, 127
    %vm1122 = vcmp.lt.s32.totalorder %v1121, 33
    %v1123 = vsel %vm1122, %v1117, %v1119
    %v1124 = vsel %vm1122, %v1115, %v1117
    %v1125 = vsel %vm1122, %v1113, %v1115
    %v1126 = vsel %vm1122, %v1111, %v1113
    %v1127 = vsel %vm1122, %v1109, %v1111
    %v1128 = vsel %vm1122, %v1107, %v1109
    %v1129 = vsel %vm1122, %v1105, %v1107
    %v1130 = vsel %vm1122, %v1119, %v1105
    %v1131 = vld [vmem:[#allocation5] ss:$8 sm:$0xf]
    %v1132 = vld [vmem:[#allocation5] ss:$8 sm:$0xf0]
    %v1133 = vor.u32 %v1131, %v1132
    %v1135 = vperm.slane %v1133, 0
    %v1136 = vperm.slane %v1133, 1
    %v1137 = vperm.slane %v1133, 2
    %v1138 = vperm.slane %v1133, 3
    %v1139 = vperm.slane %v1133, 4
    %v1140 = vperm.slane %v1133, 5
    %v1141 = vperm.slane %v1133, 6
    %v1142 = vperm.slane %v1133, 7
    %v1151 = vmul.f32 %v1130, %v1135
    %v1152 = vmul.f32 %v1129, %v1136
    %v1153 = vmul.f32 %v1128, %v1137
    %v1154 = vmul.f32 %v1127, %v1138
    %v1155 = vmul.f32 %v1126, %v1139
    %v1156 = vmul.f32 %v1125, %v1140
    %v1157 = vmul.f32 %v1124, %v1141
    %v1158 = vmul.f32 %v1123, %v1142
    %1159 = vrot.lane.b32.xlu0 %v876, 32
    %v1160 = vpop.permute.xlu0 %1159
    %1161 = vrot.lane.b32.xlu0 %v904, 32
    %v1162 = vpop.permute.xlu0 %1161
    %1163 = vrot.lane.b32.xlu0 %v932, 32
    %v1164 = vpop.permute.xlu0 %1163
    %1165 = vrot.lane.b32.xlu0 %v960, 32
    %v1166 = vpop.permute.xlu0 %1165
    %1167 = vrot.lane.b32.xlu0 %v988, 32
    %v1168 = vpop.permute.xlu0 %1167
    %1169 = vrot.lane.b32.xlu0 %v1016, 32
    %v1170 = vpop.permute.xlu0 %1169
    %1171 = vrot.lane.b32.xlu0 %v1044, 32
    %v1172 = vpop.permute.xlu0 %1171
    %1173 = vrot.lane.b32.xlu0 %v1072, 32
    %v1174 = vpop.permute.xlu0 %1173
    %vm1175 = vcmp.lt.s32.totalorder %v1121, 32
    %v1176 = vsel %vm1175, %v1172, %v1174
    %v1177 = vsel %vm1175, %v1170, %v1172
    %v1178 = vsel %vm1175, %v1168, %v1170
    %v1179 = vsel %vm1175, %v1166, %v1168
    %v1180 = vsel %vm1175, %v1164, %v1166
    %v1181 = vsel %vm1175, %v1162, %v1164
    %v1182 = vsel %vm1175, %v1160, %v1162
    %v1183 = vsel %vm1175, %v1174, %v1160
    %s1184 = scalar_lea.vmem [#allocation5], 1
    %v1185 = vld [vmem:[%s1184] ss:$8 sm:$0xf]
    %v1186 = vld [vmem:[%s1184] ss:$8 sm:$0xf0]
    %v1187 = vor.u32 %v1185, %v1186
    %v1189 = vperm.slane %v1187, 0
    %v1190 = vperm.slane %v1187, 1
    %v1191 = vperm.slane %v1187, 2
    %v1192 = vperm.slane %v1187, 3
    %v1193 = vperm.slane %v1187, 4
    %v1194 = vperm.slane %v1187, 5
    %v1195 = vperm.slane %v1187, 6
    %v1196 = vperm.slane %v1187, 7
    %v1205 = vmul.f32 %v1183, %v1189
    %v1206 = vmul.f32 %v1182, %v1190
    %v1207 = vmul.f32 %v1181, %v1191
    %v1208 = vmul.f32 %v1180, %v1192
    %v1209 = vmul.f32 %v1179, %v1193
    %v1210 = vmul.f32 %v1178, %v1194
    %v1211 = vmul.f32 %v1177, %v1195
    %v1212 = vmul.f32 %v1176, %v1196
    %1213 = vrot.lane.b32.xlu0 %v876, 31
    %v1214 = vpop.permute.xlu0 %1213
    %1215 = vrot.lane.b32.xlu0 %v904, 31
    %v1216 = vpop.permute.xlu0 %1215
    %1217 = vrot.lane.b32.xlu0 %v932, 31
    %v1218 = vpop.permute.xlu0 %1217
    %1219 = vrot.lane.b32.xlu0 %v960, 31
    %v1220 = vpop.permute.xlu0 %1219
    %1221 = vrot.lane.b32.xlu0 %v988, 31
    %v1222 = vpop.permute.xlu0 %1221
    %1223 = vrot.lane.b32.xlu0 %v1016, 31
    %v1224 = vpop.permute.xlu0 %1223
    %1225 = vrot.lane.b32.xlu0 %v1044, 31
    %v1226 = vpop.permute.xlu0 %1225
    %1227 = vrot.lane.b32.xlu0 %v1072, 31
    %v1228 = vpop.permute.xlu0 %1227
    %vm1229 = vcmp.lt.s32.totalorder %v1121, 31
    %v1230 = vsel %vm1229, %v1226, %v1228
    %v1231 = vsel %vm1229, %v1224, %v1226
    %v1232 = vsel %vm1229, %v1222, %v1224
    %v1233 = vsel %vm1229, %v1220, %v1222
    %v1234 = vsel %vm1229, %v1218, %v1220
    %v1235 = vsel %vm1229, %v1216, %v1218
    %v1236 = vsel %vm1229, %v1214, %v1216
    %v1237 = vsel %vm1229, %v1228, %v1214
    %s1238 = scalar_lea.vmem [#allocation5], 2
    %v1239 = vld [vmem:[%s1238] ss:$8 sm:$0xf]
    %v1240 = vld [vmem:[%s1238] ss:$8 sm:$0xf0]
    %v1241 = vor.u32 %v1239, %v1240
    %v1243 = vperm.slane %v1241, 0
    %v1244 = vperm.slane %v1241, 1
    %v1245 = vperm.slane %v1241, 2
    %v1246 = vperm.slane %v1241, 3
    %v1247 = vperm.slane %v1241, 4
    %v1248 = vperm.slane %v1241, 5
    %v1249 = vperm.slane %v1241, 6
    %v1250 = vperm.slane %v1241, 7
    %v1259 = vmul.f32 %v1237, %v1243
    %v1260 = vmul.f32 %v1236, %v1244
    %v1261 = vmul.f32 %v1235, %v1245
    %v1262 = vmul.f32 %v1234, %v1246
    %v1263 = vmul.f32 %v1233, %v1247
    %v1264 = vmul.f32 %v1232, %v1248
    %v1265 = vmul.f32 %v1231, %v1249
    %v1266 = vmul.f32 %v1230, %v1250
    %1267 = vrot.lane.b32.xlu0 %v876, 1
    %v1268 = vpop.permute.xlu0 %1267
    %1269 = vrot.lane.b32.xlu0 %v904, 1
    %v1270 = vpop.permute.xlu0 %1269
    %1271 = vrot.lane.b32.xlu0 %v932, 1
    %v1272 = vpop.permute.xlu0 %1271
    %1273 = vrot.lane.b32.xlu0 %v960, 1
    %v1274 = vpop.permute.xlu0 %1273
    %1275 = vrot.lane.b32.xlu0 %v988, 1
    %v1276 = vpop.permute.xlu0 %1275
    %1277 = vrot.lane.b32.xlu0 %v1016, 1
    %v1278 = vpop.permute.xlu0 %1277
    %1279 = vrot.lane.b32.xlu0 %v1044, 1
    %v1280 = vpop.permute.xlu0 %1279
    %1281 = vrot.lane.b32.xlu0 %v1072, 1
    %v1282 = vpop.permute.xlu0 %1281
    %vm1283 = vcmp.lt.s32.totalorder %v1121, 1
    %v1284 = vsel %vm1283, %v1280, %v1282
    %v1285 = vsel %vm1283, %v1278, %v1280
    %v1286 = vsel %vm1283, %v1276, %v1278
    %v1287 = vsel %vm1283, %v1274, %v1276
    %v1288 = vsel %vm1283, %v1272, %v1274
    %v1289 = vsel %vm1283, %v1270, %v1272
    %v1290 = vsel %vm1283, %v1268, %v1270
    %v1291 = vsel %vm1283, %v1282, %v1268
    %s1292 = scalar_lea.vmem [#allocation5], 3
    %v1293 = vld [vmem:[%s1292] ss:$8 sm:$0xf]
    %v1294 = vld [vmem:[%s1292] ss:$8 sm:$0xf0]
    %v1295 = vor.u32 %v1293, %v1294
    %v1297 = vperm.slane %v1295, 0
    %v1298 = vperm.slane %v1295, 1
    %v1299 = vperm.slane %v1295, 2
    %v1300 = vperm.slane %v1295, 3
    %v1301 = vperm.slane %v1295, 4
    %v1302 = vperm.slane %v1295, 5
    %v1303 = vperm.slane %v1295, 6
    %v1304 = vperm.slane %v1295, 7
    %v1313 = vmul.f32 %v1291, %v1297
    %v1314 = vmul.f32 %v1290, %v1298
    %v1315 = vmul.f32 %v1289, %v1299
    %v1316 = vmul.f32 %v1288, %v1300
    %v1317 = vmul.f32 %v1287, %v1301
    %v1318 = vmul.f32 %v1286, %v1302
    %v1319 = vmul.f32 %v1285, %v1303
    %v1320 = vmul.f32 %v1284, %v1304
    %1321 = vrot.lane.b32.xlu0 %v876, 127
    %v1322 = vpop.permute.xlu0 %1321
    %1323 = vrot.lane.b32.xlu0 %v904, 127
    %v1324 = vpop.permute.xlu0 %1323
    %1325 = vrot.lane.b32.xlu0 %v932, 127
    %v1326 = vpop.permute.xlu0 %1325
    %1327 = vrot.lane.b32.xlu0 %v960, 127
    %v1328 = vpop.permute.xlu0 %1327
    %1329 = vrot.lane.b32.xlu0 %v988, 127
    %v1330 = vpop.permute.xlu0 %1329
    %1331 = vrot.lane.b32.xlu0 %v1016, 127
    %v1332 = vpop.permute.xlu0 %1331
    %1333 = vrot.lane.b32.xlu0 %v1044, 127
    %v1334 = vpop.permute.xlu0 %1333
    %1335 = vrot.lane.b32.xlu0 %v1072, 127
    %v1336 = vpop.permute.xlu0 %1335
    %vm1337 = vcmp.lt.s32.totalorder %v1121, 127
    %v1338 = vsel %vm1337, %v1334, %v1336
    %v1339 = vsel %vm1337, %v1332, %v1334
    %v1340 = vsel %vm1337, %v1330, %v1332
    %v1341 = vsel %vm1337, %v1328, %v1330
    %v1342 = vsel %vm1337, %v1326, %v1328
    %v1343 = vsel %vm1337, %v1324, %v1326
    %v1344 = vsel %vm1337, %v1322, %v1324
    %v1345 = vsel %vm1337, %v1336, %v1322
    %s1346 = scalar_lea.vmem [#allocation5], 5
    %v1347 = vld [vmem:[%s1346] ss:$8 sm:$0xf]
    %v1348 = vld [vmem:[%s1346] ss:$8 sm:$0xf0]
    %v1349 = vor.u32 %v1347, %v1348
    %v1351 = vperm.slane %v1349, 0
    %v1352 = vperm.slane %v1349, 1
    %v1353 = vperm.slane %v1349, 2
    %v1354 = vperm.slane %v1349, 3
    %v1355 = vperm.slane %v1349, 4
    %v1356 = vperm.slane %v1349, 5
    %v1357 = vperm.slane %v1349, 6
    %v1358 = vperm.slane %v1349, 7
    %v1367 = vmul.f32 %v1344, %v1351
    %v1368 = vmul.f32 %v1343, %v1352
    %v1369 = vmul.f32 %v1342, %v1353
    %v1370 = vmul.f32 %v1341, %v1354
    %v1371 = vmul.f32 %v1340, %v1355
    %v1372 = vmul.f32 %v1339, %v1356
    %v1373 = vmul.f32 %v1338, %v1357
    %v1374 = vmul.f32 %v1345, %v1358
    %1375 = vrot.lane.b32.xlu0 %v876, 97
    %v1376 = vpop.permute.xlu0 %1375
    %1377 = vrot.lane.b32.xlu0 %v904, 97
    %v1378 = vpop.permute.xlu0 %1377
    %1379 = vrot.lane.b32.xlu0 %v932, 97
    %v1380 = vpop.permute.xlu0 %1379
    %1381 = vrot.lane.b32.xlu0 %v960, 97
    %v1382 = vpop.permute.xlu0 %1381
    %1383 = vrot.lane.b32.xlu0 %v988, 97
    %v1384 = vpop.permute.xlu0 %1383
    %1385 = vrot.lane.b32.xlu0 %v1016, 97
    %v1386 = vpop.permute.xlu0 %1385
    %1387 = vrot.lane.b32.xlu0 %v1044, 97
    %v1388 = vpop.permute.xlu0 %1387
    %1389 = vrot.lane.b32.xlu0 %v1072, 97
    %v1390 = vpop.permute.xlu0 %1389
    %vm1391 = vcmp.lt.s32.totalorder %v1121, 97
    %v1392 = vsel %vm1391, %v1388, %v1390
    %v1393 = vsel %vm1391, %v1386, %v1388
    %v1394 = vsel %vm1391, %v1384, %v1386
    %v1395 = vsel %vm1391, %v1382, %v1384
    %v1396 = vsel %vm1391, %v1380, %v1382
    %v1397 = vsel %vm1391, %v1378, %v1380
    %v1398 = vsel %vm1391, %v1376, %v1378
    %v1399 = vsel %vm1391, %v1390, %v1376
    %s1400 = scalar_lea.vmem [#allocation5], 6
    %v1401 = vld [vmem:[%s1400] ss:$8 sm:$0xf]
    %v1402 = vld [vmem:[%s1400] ss:$8 sm:$0xf0]
    %v1403 = vor.u32 %v1401, %v1402
    %v1405 = vperm.slane %v1403, 0
    %v1406 = vperm.slane %v1403, 1
    %v1407 = vperm.slane %v1403, 2
    %v1408 = vperm.slane %v1403, 3
    %v1409 = vperm.slane %v1403, 4
    %v1410 = vperm.slane %v1403, 5
    %v1411 = vperm.slane %v1403, 6
    %v1412 = vperm.slane %v1403, 7
    %v1421 = vmul.f32 %v1398, %v1405
    %v1422 = vmul.f32 %v1397, %v1406
    %v1423 = vmul.f32 %v1396, %v1407
    %v1424 = vmul.f32 %v1395, %v1408
    %v1425 = vmul.f32 %v1394, %v1409
    %v1426 = vmul.f32 %v1393, %v1410
    %v1427 = vmul.f32 %v1392, %v1411
    %v1428 = vmul.f32 %v1399, %v1412
    %1429 = vrot.lane.b32.xlu0 %v876, 96
    %v1430 = vpop.permute.xlu0 %1429
    %1431 = vrot.lane.b32.xlu0 %v904, 96
    %v1432 = vpop.permute.xlu0 %1431
    %1433 = vrot.lane.b32.xlu0 %v932, 96
    %v1434 = vpop.permute.xlu0 %1433
    %1435 = vrot.lane.b32.xlu0 %v960, 96
    %v1436 = vpop.permute.xlu0 %1435
    %1437 = vrot.lane.b32.xlu0 %v988, 96
    %v1438 = vpop.permute.xlu0 %1437
    %1439 = vrot.lane.b32.xlu0 %v1016, 96
    %v1440 = vpop.permute.xlu0 %1439
    %1441 = vrot.lane.b32.xlu0 %v1044, 96
    %v1442 = vpop.permute.xlu0 %1441
    %1443 = vrot.lane.b32.xlu0 %v1072, 96
    %v1444 = vpop.permute.xlu0 %1443
    %vm1445 = vcmp.lt.s32.totalorder %v1121, 96
    %v1446 = vsel %vm1445, %v1442, %v1444
    %v1447 = vsel %vm1445, %v1440, %v1442
    %v1448 = vsel %vm1445, %v1438, %v1440
    %v1449 = vsel %vm1445, %v1436, %v1438
    %v1450 = vsel %vm1445, %v1434, %v1436
    %v1451 = vsel %vm1445, %v1432, %v1434
    %v1452 = vsel %vm1445, %v1430, %v1432
    %v1453 = vsel %vm1445, %v1444, %v1430
    %s1454 = scalar_lea.vmem [#allocation5], 7
    %v1455 = vld [vmem:[%s1454] ss:$8 sm:$0xf]
    %v1456 = vld [vmem:[%s1454] ss:$8 sm:$0xf0]
    %v1457 = vor.u32 %v1455, %v1456
    %v1459 = vperm.slane %v1457, 0
    %v1460 = vperm.slane %v1457, 1
    %v1461 = vperm.slane %v1457, 2
    %v1462 = vperm.slane %v1457, 3
    %v1463 = vperm.slane %v1457, 4
    %v1464 = vperm.slane %v1457, 5
    %v1465 = vperm.slane %v1457, 6
    %v1466 = vperm.slane %v1457, 7
    %v1475 = vmul.f32 %v1452, %v1459
    %v1476 = vmul.f32 %v1451, %v1460
    %v1477 = vmul.f32 %v1450, %v1461
    %v1478 = vmul.f32 %v1449, %v1462
    %v1479 = vmul.f32 %v1448, %v1463
    %v1480 = vmul.f32 %v1447, %v1464
    %v1481 = vmul.f32 %v1446, %v1465
    %v1482 = vmul.f32 %v1453, %v1466
    %1483 = vrot.lane.b32.xlu0 %v876, 95
    %v1484 = vpop.permute.xlu0 %1483
    %1485 = vrot.lane.b32.xlu0 %v904, 95
    %v1486 = vpop.permute.xlu0 %1485
    %1487 = vrot.lane.b32.xlu0 %v932, 95
    %v1488 = vpop.permute.xlu0 %1487
    %1489 = vrot.lane.b32.xlu0 %v960, 95
    %v1490 = vpop.permute.xlu0 %1489
    %1491 = vrot.lane.b32.xlu0 %v988, 95
    %v1492 = vpop.permute.xlu0 %1491
    %1493 = vrot.lane.b32.xlu0 %v1016, 95
    %v1494 = vpop.permute.xlu0 %1493
    %1495 = vrot.lane.b32.xlu0 %v1044, 95
    %v1496 = vpop.permute.xlu0 %1495
    %1497 = vrot.lane.b32.xlu0 %v1072, 95
    %v1498 = vpop.permute.xlu0 %1497
    %vm1499 = vcmp.lt.s32.totalorder %v1121, 95
    %v1500 = vsel %vm1499, %v1496, %v1498
    %v1501 = vsel %vm1499, %v1494, %v1496
    %v1502 = vsel %vm1499, %v1492, %v1494
    %v1503 = vsel %vm1499, %v1490, %v1492
    %v1504 = vsel %vm1499, %v1488, %v1490
    %v1505 = vsel %vm1499, %v1486, %v1488
    %v1506 = vsel %vm1499, %v1484, %v1486
    %v1507 = vsel %vm1499, %v1498, %v1484
    %s1508 = scalar_lea.vmem [#allocation5], 64
    %v1509 = vld [vmem:[%s1508] ss:$8 sm:$0xf]
    %v1510 = vld [vmem:[%s1508] ss:$8 sm:$0xf0]
    %v1511 = vor.u32 %v1509, %v1510
    %v1513 = vperm.slane %v1511, 0
    %v1514 = vperm.slane %v1511, 1
    %v1515 = vperm.slane %v1511, 2
    %v1516 = vperm.slane %v1511, 3
    %v1517 = vperm.slane %v1511, 4
    %v1518 = vperm.slane %v1511, 5
    %v1519 = vperm.slane %v1511, 6
    %v1520 = vperm.slane %v1511, 7
    %v1529 = vmul.f32 %v1506, %v1513
    %v1530 = vmul.f32 %v1505, %v1514
    %v1531 = vmul.f32 %v1504, %v1515
    %v1532 = vmul.f32 %v1503, %v1516
    %v1533 = vmul.f32 %v1502, %v1517
    %v1534 = vmul.f32 %v1501, %v1518
    %v1535 = vmul.f32 %v1500, %v1519
    %v1536 = vmul.f32 %v1507, %v1520
    %v1537 = vpack.c.bf16 %v1205, %v1151
    %v1538 = vpack.c.bf16 %v1206, %v1152
    %v1539 = vpack.c.bf16 %v1207, %v1153
    %v1540 = vpack.c.bf16 %v1208, %v1154
    %v1541 = vpack.c.bf16 %v1209, %v1155
    %v1542 = vpack.c.bf16 %v1210, %v1156
    %v1543 = vpack.c.bf16 %v1211, %v1157
    %v1544 = vpack.c.bf16 %v1212, %v1158
    %v1545 = vpack.c.bf16 %v1313, %v1259
    %v1546 = vpack.c.bf16 %v1314, %v1260
    %v1547 = vpack.c.bf16 %v1315, %v1261
    %v1548 = vpack.c.bf16 %v1316, %v1262
    %v1549 = vpack.c.bf16 %v1317, %v1263
    %v1550 = vpack.c.bf16 %v1318, %v1264
    %v1551 = vpack.c.bf16 %v1319, %v1265
    %v1552 = vpack.c.bf16 %v1320, %v1266
    %v1553 = vpack.c.bf16 %v1367, %v876
    %v1554 = vpack.c.bf16 %v1368, %v904
    %v1555 = vpack.c.bf16 %v1369, %v932
    %v1556 = vpack.c.bf16 %v1370, %v960
    %v1557 = vpack.c.bf16 %v1371, %v988
    %v1558 = vpack.c.bf16 %v1372, %v1016
    %v1559 = vpack.c.bf16 %v1373, %v1044
    %v1560 = vpack.c.bf16 %v1374, %v1072
    %v1561 = vpack.c.bf16 %v1475, %v1421
    %v1562 = vpack.c.bf16 %v1476, %v1422
    %v1563 = vpack.c.bf16 %v1477, %v1423
    %v1564 = vpack.c.bf16 %v1478, %v1424
    %v1565 = vpack.c.bf16 %v1479, %v1425
    %v1566 = vpack.c.bf16 %v1480, %v1426
    %v1567 = vpack.c.bf16 %v1481, %v1427
    %v1568 = vpack.c.bf16 %v1482, %v1428
    %v1569 = vpack.c.bf16 %v1529, %v1529
    %v1570 = vpack.c.bf16 %v1530, %v1530
    %v1571 = vpack.c.bf16 %v1531, %v1531
    %v1572 = vpack.c.bf16 %v1532, %v1532
    %v1573 = vpack.c.bf16 %v1533, %v1533
    %v1574 = vpack.c.bf16 %v1534, %v1534
    %v1575 = vpack.c.bf16 %v1535, %v1535
    %v1576 = vpack.c.bf16 %v1536, %v1536
    %1578 = vset.pattern.permute.xlu0 0
    %1579 = vperm.xlu0 %1578, %v1078
    %v1580 = vpop.permute.xlu0 %1579
    %1583 = vset.pattern.permute.xlu0 0
    %1584 = vperm.xlu0 %1583, %v1079
    %v1585 = vpop.permute.xlu0 %1584
    %v1589 = vunpack.c.l.b16 %v1076
    %v1590 = vunpack.c.l.b16 %v1077
    %v1591 = vpack.c.b16 %v1590, %v1589
    %vm1592 = vcmask 588800
    %v1594 = vsel %vm1592, %v1591, 0
    %vm1596 = vcmask 1043456
    %v1598 = vsel %vm1596, %v1569, 0
    %v1601 = vsel %vm1596, %v1570, 0
    %v1604 = vsel %vm1596, %v1571, 0
    %v1607 = vsel %vm1596, %v1572, 0
    %v1610 = vsel %vm1596, %v1573, 0
    %v1613 = vsel %vm1596, %v1574, 0
    %v1616 = vsel %vm1596, %v1575, 0
    %v1619 = vsel %vm1596, %v1576, 0
    %1621 = vmatpush.bf16.msra.mxu0 0
    %1622 = vmatpush.bf16.msra.mxu0 0
    %1623 = vmatpush.bf16.msra.mxu0 0
    %1624 = vmatpush.bf16.msra.mxu0 %v1598
    %1625 = vmatpush.bf16.msra.mxu0 %v1561
    %1626 = vmatpush.bf16.msra.mxu0 %v1553
    %1627 = vmatpush.bf16.msra.mxu0 %v1545
    %1628 = vmatpush.bf16.msra.mxu0 %v1537
    %1629 = vmatmul.bf16.gmra.mxu0 %v1594
    %v1630 = vpop.f32.mrf.mxu0
    %v1631 = vadd.f32 %v1580, %v1630
    %v1632 = vpop.f32.mrf.mxu0
    %v1633 = vadd.f32 %v1585, %v1632
    %1634 = vdwg.mxu0
    %1635 = vmatpush.bf16.msra.mxu0 0
    %1636 = vmatpush.bf16.msra.mxu0 0
    %1637 = vmatpush.bf16.msra.mxu0 0
    %1638 = vmatpush.bf16.msra.mxu0 %v1601
    %1639 = vmatpush.bf16.msra.mxu0 %v1562
    %1640 = vmatpush.bf16.msra.mxu0 %v1554
    %1641 = vmatpush.bf16.msra.mxu0 %v1546
    %1642 = vmatpush.bf16.msra.mxu0 %v1538
    %1643 = vmatmul.bf16.gmra.mxu0 %v1594
    %v1644 = vpop.f32.mrf.mxu0
    %v1645 = vadd.f32 %v1580, %v1644
    %v1646 = vpop.f32.mrf.mxu0
    %v1647 = vadd.f32 %v1585, %v1646
    %1648 = vdwg.mxu0
    %1649 = vmatpush.bf16.msra.mxu0 0
    %1650 = vmatpush.bf16.msra.mxu0 0
    %1651 = vmatpush.bf16.msra.mxu0 0
    %1652 = vmatpush.bf16.msra.mxu0 %v1604
    %1653 = vmatpush.bf16.msra.mxu0 %v1563
    %1654 = vmatpush.bf16.msra.mxu0 %v1555
    %1655 = vmatpush.bf16.msra.mxu0 %v1547
    %1656 = vmatpush.bf16.msra.mxu0 %v1539
    %1657 = vmatmul.bf16.gmra.mxu0 %v1594
    %v1658 = vpop.f32.mrf.mxu0
    %v1659 = vadd.f32 %v1580, %v1658
    %v1660 = vpop.f32.mrf.mxu0
    %v1661 = vadd.f32 %v1585, %v1660
    %1662 = vdwg.mxu0
    %1663 = vmatpush.bf16.msra.mxu0 0
    %1664 = vmatpush.bf16.msra.mxu0 0
    %1665 = vmatpush.bf16.msra.mxu0 0
    %1666 = vmatpush.bf16.msra.mxu0 %v1607
    %1667 = vmatpush.bf16.msra.mxu0 %v1564
    %1668 = vmatpush.bf16.msra.mxu0 %v1556
    %1669 = vmatpush.bf16.msra.mxu0 %v1548
    %1670 = vmatpush.bf16.msra.mxu0 %v1540
    %1671 = vmatmul.bf16.gmra.mxu0 %v1594
    %v1672 = vpop.f32.mrf.mxu0
    %v1673 = vadd.f32 %v1580, %v1672
    %v1674 = vpop.f32.mrf.mxu0
    %v1675 = vadd.f32 %v1585, %v1674
    %1676 = vdwg.mxu0
    %1677 = vmatpush.bf16.msra.mxu0 0
    %1678 = vmatpush.bf16.msra.mxu0 0
    %1679 = vmatpush.bf16.msra.mxu0 0
    %1680 = vmatpush.bf16.msra.mxu0 %v1610
    %1681 = vmatpush.bf16.msra.mxu0 %v1565
    %1682 = vmatpush.bf16.msra.mxu0 %v1557
    %1683 = vmatpush.bf16.msra.mxu0 %v1549
    %1684 = vmatpush.bf16.msra.mxu0 %v1541
    %1685 = vmatmul.bf16.gmra.mxu0 %v1594
    %v1686 = vpop.f32.mrf.mxu0
    %v1687 = vadd.f32 %v1580, %v1686
    %v1688 = vpop.f32.mrf.mxu0
    %v1689 = vadd.f32 %v1585, %v1688
    %1690 = vdwg.mxu0
    %1691 = vmatpush.bf16.msra.mxu0 0
    %1692 = vmatpush.bf16.msra.mxu0 0
    %1693 = vmatpush.bf16.msra.mxu0 0
    %1694 = vmatpush.bf16.msra.mxu0 %v1613
    %1695 = vmatpush.bf16.msra.mxu0 %v1566
    %1696 = vmatpush.bf16.msra.mxu0 %v1558
    %1697 = vmatpush.bf16.msra.mxu0 %v1550
    %1698 = vmatpush.bf16.msra.mxu0 %v1542
    %1699 = vmatmul.bf16.gmra.mxu0 %v1594
    %v1700 = vpop.f32.mrf.mxu0
    %v1701 = vadd.f32 %v1580, %v1700
    %v1702 = vpop.f32.mrf.mxu0
    %v1703 = vadd.f32 %v1585, %v1702
    %1704 = vdwg.mxu0
    %1705 = vmatpush.bf16.msra.mxu0 0
    %1706 = vmatpush.bf16.msra.mxu0 0
    %1707 = vmatpush.bf16.msra.mxu0 0
    %1708 = vmatpush.bf16.msra.mxu0 %v1616
    %1709 = vmatpush.bf16.msra.mxu0 %v1567
    %1710 = vmatpush.bf16.msra.mxu0 %v1559
    %1711 = vmatpush.bf16.msra.mxu0 %v1551
    %1712 = vmatpush.bf16.msra.mxu0 %v1543
    %1713 = vmatmul.bf16.gmra.mxu0 %v1594
    %v1714 = vpop.f32.mrf.mxu0
    %v1715 = vadd.f32 %v1580, %v1714
    %v1716 = vpop.f32.mrf.mxu0
    %v1717 = vadd.f32 %v1585, %v1716
    %1718 = vdwg.mxu0
    %1719 = vmatpush.bf16.msra.mxu0 0
    %1720 = vmatpush.bf16.msra.mxu0 0
    %1721 = vmatpush.bf16.msra.mxu0 0
    %1722 = vmatpush.bf16.msra.mxu0 %v1619
    %1723 = vmatpush.bf16.msra.mxu0 %v1568
    %1724 = vmatpush.bf16.msra.mxu0 %v1560
    %1725 = vmatpush.bf16.msra.mxu0 %v1552
    %1726 = vmatpush.bf16.msra.mxu0 %v1544
    %1727 = vmatmul.bf16.gmra.mxu0 %v1594
    %v1728 = vpop.f32.mrf.mxu0
    %v1729 = vadd.f32 %v1580, %v1728
    %v1730 = vpop.f32.mrf.mxu0
    %v1731 = vadd.f32 %v1585, %v1730
    %1732 = vdwg.mxu0
    %vm1733 = vcmp.gt.f32.partialorder %v1631, 0.0
    %vm1734 = vcmp.gt.f32.partialorder %v1645, 0.0
    %vm1735 = vcmp.gt.f32.partialorder %v1659, 0.0
    %vm1736 = vcmp.gt.f32.partialorder %v1673, 0.0
    %vm1737 = vcmp.gt.f32.partialorder %v1687, 0.0
    %vm1738 = vcmp.gt.f32.partialorder %v1701, 0.0
    %vm1739 = vcmp.gt.f32.partialorder %v1715, 0.0
    %vm1740 = vcmp.gt.f32.partialorder %v1729, 0.0
    %v1741 = vmul.f32 %v1631, 0.05
    %v1742 = vmul.f32 %v1645, 0.05
    %v1743 = vmul.f32 %v1659, 0.05
    %v1744 = vmul.f32 %v1673, 0.05
    %v1745 = vmul.f32 %v1687, 0.05
    %v1746 = vmul.f32 %v1701, 0.05
    %v1747 = vmul.f32 %v1715, 0.05
    %v1748 = vmul.f32 %v1729, 0.05
    %v1749 = vsel %vm1733, %v1631, %v1741
    %v1750 = vsel %vm1734, %v1645, %v1742
    %v1751 = vsel %vm1735, %v1659, %v1743
    %v1752 = vsel %vm1736, %v1673, %v1744
    %v1753 = vsel %vm1737, %v1687, %v1745
    %v1754 = vsel %vm1738, %v1701, %v1746
    %v1755 = vsel %vm1739, %v1715, %v1747
    %v1756 = vsel %vm1740, %v1729, %v1748
    %vm1757 = vcmp.gt.f32.partialorder %v1749, 0.0
    %vm1758 = vcmp.gt.f32.partialorder %v1750, 0.0
    %vm1759 = vcmp.gt.f32.partialorder %v1751, 0.0
    %vm1760 = vcmp.gt.f32.partialorder %v1752, 0.0
    %vm1761 = vcmp.gt.f32.partialorder %v1753, 0.0
    %vm1762 = vcmp.gt.f32.partialorder %v1754, 0.0
    %vm1763 = vcmp.gt.f32.partialorder %v1755, 0.0
    %vm1764 = vcmp.gt.f32.partialorder %v1756, 0.0
    %v1765 = vmul.f32 %v1749, 0.05
    %v1766 = vmul.f32 %v1750, 0.05
    %v1767 = vmul.f32 %v1751, 0.05
    %v1768 = vmul.f32 %v1752, 0.05
    %v1769 = vmul.f32 %v1753, 0.05
    %v1770 = vmul.f32 %v1754, 0.05
    %v1771 = vmul.f32 %v1755, 0.05
    %v1772 = vmul.f32 %v1756, 0.05
    %v1773 = vsel %vm1757, %v1749, %v1765
    %v1774 = vsel %vm1758, %v1750, %v1766
    %v1775 = vsel %vm1759, %v1751, %v1767
    %v1776 = vsel %vm1760, %v1752, %v1768
    %v1777 = vsel %vm1761, %v1753, %v1769
    %v1778 = vsel %vm1762, %v1754, %v1770
    %v1779 = vsel %vm1763, %v1755, %v1771
    %v1780 = vsel %vm1764, %v1756, %v1772
    %vm1781 = vcmp.gt.f32.partialorder %v1633, 0.0
    %vm1782 = vcmp.gt.f32.partialorder %v1647, 0.0
    %vm1783 = vcmp.gt.f32.partialorder %v1661, 0.0
    %vm1784 = vcmp.gt.f32.partialorder %v1675, 0.0
    %vm1785 = vcmp.gt.f32.partialorder %v1689, 0.0
    %vm1786 = vcmp.gt.f32.partialorder %v1703, 0.0
    %vm1787 = vcmp.gt.f32.partialorder %v1717, 0.0
    %vm1788 = vcmp.gt.f32.partialorder %v1731, 0.0
    %v1789 = vmul.f32 %v1633, 0.05
    %v1790 = vmul.f32 %v1647, 0.05
    %v1791 = vmul.f32 %v1661, 0.05
    %v1792 = vmul.f32 %v1675, 0.05
    %v1793 = vmul.f32 %v1689, 0.05
    %v1794 = vmul.f32 %v1703, 0.05
    %v1795 = vmul.f32 %v1717, 0.05
    %v1796 = vmul.f32 %v1731, 0.05
    %v1797 = vsel %vm1781, %v1633, %v1789
    %v1798 = vsel %vm1782, %v1647, %v1790
    %v1799 = vsel %vm1783, %v1661, %v1791
    %v1800 = vsel %vm1784, %v1675, %v1792
    %v1801 = vsel %vm1785, %v1689, %v1793
    %v1802 = vsel %vm1786, %v1703, %v1794
    %v1803 = vsel %vm1787, %v1717, %v1795
    %v1804 = vsel %vm1788, %v1731, %v1796
    %v1805 = vadd.f32 %v1773, %v1797
    %v1806 = vadd.f32 %v1774, %v1798
    %v1807 = vadd.f32 %v1775, %v1799
    %v1808 = vadd.f32 %v1776, %v1800
    %v1809 = vadd.f32 %v1777, %v1801
    %v1810 = vadd.f32 %v1778, %v1802
    %v1811 = vadd.f32 %v1779, %v1803
    %v1812 = vadd.f32 %v1780, %v1804
    %vm1813 = vcmp.gt.f32.partialorder %v1805, 0.0
    %vm1814 = vcmp.gt.f32.partialorder %v1806, 0.0
    %vm1815 = vcmp.gt.f32.partialorder %v1807, 0.0
    %vm1816 = vcmp.gt.f32.partialorder %v1808, 0.0
    %vm1817 = vcmp.gt.f32.partialorder %v1809, 0.0
    %vm1818 = vcmp.gt.f32.partialorder %v1810, 0.0
    %vm1819 = vcmp.gt.f32.partialorder %v1811, 0.0
    %vm1820 = vcmp.gt.f32.partialorder %v1812, 0.0
    %v1821 = vmul.f32 %v1805, 0.05
    %v1822 = vmul.f32 %v1806, 0.05
    %v1823 = vmul.f32 %v1807, 0.05
    %v1824 = vmul.f32 %v1808, 0.05
    %v1825 = vmul.f32 %v1809, 0.05
    %v1826 = vmul.f32 %v1810, 0.05
    %v1827 = vmul.f32 %v1811, 0.05
    %v1828 = vmul.f32 %v1812, 0.05
    %v1829 = vsel %vm1813, %v1805, %v1821
    %v1830 = vsel %vm1814, %v1806, %v1822
    %v1831 = vsel %vm1815, %v1807, %v1823
    %v1832 = vsel %vm1816, %v1808, %v1824
    %v1833 = vsel %vm1817, %v1809, %v1825
    %v1834 = vsel %vm1818, %v1810, %v1826
    %v1835 = vsel %vm1819, %v1811, %v1827
    %v1836 = vsel %vm1820, %v1812, %v1828
    %1837 = vst [vmem:[#allocation8] sm:$0xff] %v1829
    %1838 = vst [vmem:[#allocation8 + $0x8] sm:$0xff] %v1830
    %1839 = vst [vmem:[#allocation8 + $0x10] sm:$0xff] %v1831
    %1840 = vst [vmem:[#allocation8 + $0x18] sm:$0xff] %v1832
    %1841 = vst [vmem:[#allocation8 + $0x20] sm:$0xff] %v1833
    %1842 = vst [vmem:[#allocation8 + $0x28] sm:$0xff] %v1834
    %1843 = vst [vmem:[#allocation8 + $0x30] sm:$0xff] %v1835
    %1844 = vst [vmem:[#allocation8 + $0x38] sm:$0xff] %v1836
    %1853 = vst.sshfl [vmem:[#allocation1] sm:$0xff pattern:$0x73625140] %v878
    %1854 = vst.sshfl [vmem:[#allocation1 + $0x8] sm:$0xff pattern:$0x73625140] %v906
    %1855 = vst.sshfl [vmem:[#allocation1 + $0x10] sm:$0xff pattern:$0x73625140] %v934
    %1856 = vst.sshfl [vmem:[#allocation1 + $0x18] sm:$0xff pattern:$0x73625140] %v962
    %1857 = vst.sshfl [vmem:[#allocation1 + $0x20] sm:$0xff pattern:$0x73625140] %v990
    %1858 = vst.sshfl [vmem:[#allocation1 + $0x28] sm:$0xff pattern:$0x73625140] %v1018
    %1859 = vst.sshfl [vmem:[#allocation1 + $0x30] sm:$0xff pattern:$0x73625140] %v1046
    %1860 = vst.sshfl [vmem:[#allocation1 + $0x38] sm:$0xff pattern:$0x73625140] %v1074
    %s1861 = scalar_lea.vmem [#allocation1], 2
    %v1862 = vld [vmem:[%s1861] ss:$4 sm:$0xff]
    %s1863 = scalar_lea.vmem [#allocation1], 34
    %v1864 = vld [vmem:[%s1863] ss:$4 sm:$0xff]
    %s1867 = scalar_lea.vmem [#allocation9], 16
    %1868 = vst [vmem:[%s1867] sm:$0xff] %v1862
    %1869 = vst [vmem:[%s1867 + $0x8] sm:$0xff] %v1864
    %1870 = vrot.lane.b32.xlu0 %v878, 33
    %v1871 = vpop.permute.xlu0 %1870
    %1872 = vrot.lane.b32.xlu0 %v906, 33
    %v1873 = vpop.permute.xlu0 %1872
    %1874 = vrot.lane.b32.xlu0 %v934, 33
    %v1875 = vpop.permute.xlu0 %1874
    %1876 = vrot.lane.b32.xlu0 %v962, 33
    %v1877 = vpop.permute.xlu0 %1876
    %1878 = vrot.lane.b32.xlu0 %v990, 33
    %v1879 = vpop.permute.xlu0 %1878
    %1880 = vrot.lane.b32.xlu0 %v1018, 33
    %v1881 = vpop.permute.xlu0 %1880
    %1882 = vrot.lane.b32.xlu0 %v1046, 33
    %v1883 = vpop.permute.xlu0 %1882
    %1884 = vrot.lane.b32.xlu0 %v1074, 33
    %v1885 = vpop.permute.xlu0 %1884
    %v1886 = vsel %vm1122, %v1883, %v1885
    %v1887 = vsel %vm1122, %v1881, %v1883
    %v1888 = vsel %vm1122, %v1879, %v1881
    %v1889 = vsel %vm1122, %v1877, %v1879
    %v1890 = vsel %vm1122, %v1875, %v1877
    %v1891 = vsel %vm1122, %v1873, %v1875
    %v1892 = vsel %vm1122, %v1871, %v1873
    %v1893 = vsel %vm1122, %v1885, %v1871
    %v1894 = vld [vmem:[#allocation5] ss:$8 sm:$0xf]
    %v1895 = vld [vmem:[#allocation5] ss:$8 sm:$0xf0]
    %v1896 = vor.u32 %v1894, %v1895
    %v1898 = vperm.slane %v1896, 0
    %v1899 = vperm.slane %v1896, 1
    %v1900 = vperm.slane %v1896, 2
    %v1901 = vperm.slane %v1896, 3
    %v1902 = vperm.slane %v1896, 4
    %v1903 = vperm.slane %v1896, 5
    %v1904 = vperm.slane %v1896, 6
    %v1905 = vperm.slane %v1896, 7
    %v1914 = vmul.f32 %v1893, %v1898
    %v1915 = vmul.f32 %v1892, %v1899
    %v1916 = vmul.f32 %v1891, %v1900
    %v1917 = vmul.f32 %v1890, %v1901
    %v1918 = vmul.f32 %v1889, %v1902
    %v1919 = vmul.f32 %v1888, %v1903
    %v1920 = vmul.f32 %v1887, %v1904
    %v1921 = vmul.f32 %v1886, %v1905
    %1922 = vrot.lane.b32.xlu0 %v878, 32
    %v1923 = vpop.permute.xlu0 %1922
    %1924 = vrot.lane.b32.xlu0 %v906, 32
    %v1925 = vpop.permute.xlu0 %1924
    %1926 = vrot.lane.b32.xlu0 %v934, 32
    %v1927 = vpop.permute.xlu0 %1926
    %1928 = vrot.lane.b32.xlu0 %v962, 32
    %v1929 = vpop.permute.xlu0 %1928
    %1930 = vrot.lane.b32.xlu0 %v990, 32
    %v1931 = vpop.permute.xlu0 %1930
    %1932 = vrot.lane.b32.xlu0 %v1018, 32
    %v1933 = vpop.permute.xlu0 %1932
    %1934 = vrot.lane.b32.xlu0 %v1046, 32
    %v1935 = vpop.permute.xlu0 %1934
    %1936 = vrot.lane.b32.xlu0 %v1074, 32
    %v1937 = vpop.permute.xlu0 %1936
    %v1938 = vsel %vm1175, %v1935, %v1937
    %v1939 = vsel %vm1175, %v1933, %v1935
    %v1940 = vsel %vm1175, %v1931, %v1933
    %v1941 = vsel %vm1175, %v1929, %v1931
    %v1942 = vsel %vm1175, %v1927, %v1929
    %v1943 = vsel %vm1175, %v1925, %v1927
    %v1944 = vsel %vm1175, %v1923, %v1925
    %v1945 = vsel %vm1175, %v1937, %v1923
    %v1946 = vld [vmem:[%s1184] ss:$8 sm:$0xf]
    %v1947 = vld [vmem:[%s1184] ss:$8 sm:$0xf0]
    %v1948 = vor.u32 %v1946, %v1947
    %v1950 = vperm.slane %v1948, 0
    %v1951 = vperm.slane %v1948, 1
    %v1952 = vperm.slane %v1948, 2
    %v1953 = vperm.slane %v1948, 3
    %v1954 = vperm.slane %v1948, 4
    %v1955 = vperm.slane %v1948, 5
    %v1956 = vperm.slane %v1948, 6
    %v1957 = vperm.slane %v1948, 7
    %v1966 = vmul.f32 %v1945, %v1950
    %v1967 = vmul.f32 %v1944, %v1951
    %v1968 = vmul.f32 %v1943, %v1952
    %v1969 = vmul.f32 %v1942, %v1953
    %v1970 = vmul.f32 %v1941, %v1954
    %v1971 = vmul.f32 %v1940, %v1955
    %v1972 = vmul.f32 %v1939, %v1956
    %v1973 = vmul.f32 %v1938, %v1957
    %1974 = vrot.lane.b32.xlu0 %v878, 31
    %v1975 = vpop.permute.xlu0 %1974
    %1976 = vrot.lane.b32.xlu0 %v906, 31
    %v1977 = vpop.permute.xlu0 %1976
    %1978 = vrot.lane.b32.xlu0 %v934, 31
    %v1979 = vpop.permute.xlu0 %1978
    %1980 = vrot.lane.b32.xlu0 %v962, 31
    %v1981 = vpop.permute.xlu0 %1980
    %1982 = vrot.lane.b32.xlu0 %v990, 31
    %v1983 = vpop.permute.xlu0 %1982
    %1984 = vrot.lane.b32.xlu0 %v1018, 31
    %v1985 = vpop.permute.xlu0 %1984
    %1986 = vrot.lane.b32.xlu0 %v1046, 31
    %v1987 = vpop.permute.xlu0 %1986
    %1988 = vrot.lane.b32.xlu0 %v1074, 31
    %v1989 = vpop.permute.xlu0 %1988
    %v1990 = vsel %vm1229, %v1987, %v1989
    %v1991 = vsel %vm1229, %v1985, %v1987
    %v1992 = vsel %vm1229, %v1983, %v1985
    %v1993 = vsel %vm1229, %v1981, %v1983
    %v1994 = vsel %vm1229, %v1979, %v1981
    %v1995 = vsel %vm1229, %v1977, %v1979
    %v1996 = vsel %vm1229, %v1975, %v1977
    %v1997 = vsel %vm1229, %v1989, %v1975
    %v1998 = vld [vmem:[%s1238] ss:$8 sm:$0xf]
    %v1999 = vld [vmem:[%s1238] ss:$8 sm:$0xf0]
    %v2000 = vor.u32 %v1998, %v1999
    %v2002 = vperm.slane %v2000, 0
    %v2003 = vperm.slane %v2000, 1
    %v2004 = vperm.slane %v2000, 2
    %v2005 = vperm.slane %v2000, 3
    %v2006 = vperm.slane %v2000, 4
    %v2007 = vperm.slane %v2000, 5
    %v2008 = vperm.slane %v2000, 6
    %v2009 = vperm.slane %v2000, 7
    %v2018 = vmul.f32 %v1997, %v2002
    %v2019 = vmul.f32 %v1996, %v2003
    %v2020 = vmul.f32 %v1995, %v2004
    %v2021 = vmul.f32 %v1994, %v2005
    %v2022 = vmul.f32 %v1993, %v2006
    %v2023 = vmul.f32 %v1992, %v2007
    %v2024 = vmul.f32 %v1991, %v2008
    %v2025 = vmul.f32 %v1990, %v2009
    %2026 = vrot.lane.b32.xlu0 %v878, 1
    %v2027 = vpop.permute.xlu0 %2026
    %2028 = vrot.lane.b32.xlu0 %v906, 1
    %v2029 = vpop.permute.xlu0 %2028
    %2030 = vrot.lane.b32.xlu0 %v934, 1
    %v2031 = vpop.permute.xlu0 %2030
    %2032 = vrot.lane.b32.xlu0 %v962, 1
    %v2033 = vpop.permute.xlu0 %2032
    %2034 = vrot.lane.b32.xlu0 %v990, 1
    %v2035 = vpop.permute.xlu0 %2034
    %2036 = vrot.lane.b32.xlu0 %v1018, 1
    %v2037 = vpop.permute.xlu0 %2036
    %2038 = vrot.lane.b32.xlu0 %v1046, 1
    %v2039 = vpop.permute.xlu0 %2038
    %2040 = vrot.lane.b32.xlu0 %v1074, 1
    %v2041 = vpop.permute.xlu0 %2040
    %v2042 = vsel %vm1283, %v2039, %v2041
    %v2043 = vsel %vm1283, %v2037, %v2039
    %v2044 = vsel %vm1283, %v2035, %v2037
    %v2045 = vsel %vm1283, %v2033, %v2035
    %v2046 = vsel %vm1283, %v2031, %v2033
    %v2047 = vsel %vm1283, %v2029, %v2031
    %v2048 = vsel %vm1283, %v2027, %v2029
    %v2049 = vsel %vm1283, %v2041, %v2027
    %v2050 = vld [vmem:[%s1292] ss:$8 sm:$0xf]
    %v2051 = vld [vmem:[%s1292] ss:$8 sm:$0xf0]
    %v2052 = vor.u32 %v2050, %v2051
    %v2054 = vperm.slane %v2052, 0
    %v2055 = vperm.slane %v2052, 1
    %v2056 = vperm.slane %v2052, 2
    %v2057 = vperm.slane %v2052, 3
    %v2058 = vperm.slane %v2052, 4
    %v2059 = vperm.slane %v2052, 5
    %v2060 = vperm.slane %v2052, 6
    %v2061 = vperm.slane %v2052, 7
    %v2070 = vmul.f32 %v2049, %v2054
    %v2071 = vmul.f32 %v2048, %v2055
    %v2072 = vmul.f32 %v2047, %v2056
    %v2073 = vmul.f32 %v2046, %v2057
    %v2074 = vmul.f32 %v2045, %v2058
    %v2075 = vmul.f32 %v2044, %v2059
    %v2076 = vmul.f32 %v2043, %v2060
    %v2077 = vmul.f32 %v2042, %v2061
    %2078 = vrot.lane.b32.xlu0 %v878, 127
    %v2079 = vpop.permute.xlu0 %2078
    %2080 = vrot.lane.b32.xlu0 %v906, 127
    %v2081 = vpop.permute.xlu0 %2080
    %2082 = vrot.lane.b32.xlu0 %v934, 127
    %v2083 = vpop.permute.xlu0 %2082
    %2084 = vrot.lane.b32.xlu0 %v962, 127
    %v2085 = vpop.permute.xlu0 %2084
    %2086 = vrot.lane.b32.xlu0 %v990, 127
    %v2087 = vpop.permute.xlu0 %2086
    %2088 = vrot.lane.b32.xlu0 %v1018, 127
    %v2089 = vpop.permute.xlu0 %2088
    %2090 = vrot.lane.b32.xlu0 %v1046, 127
    %v2091 = vpop.permute.xlu0 %2090
    %2092 = vrot.lane.b32.xlu0 %v1074, 127
    %v2093 = vpop.permute.xlu0 %2092
    %v2094 = vsel %vm1337, %v2091, %v2093
    %v2095 = vsel %vm1337, %v2089, %v2091
    %v2096 = vsel %vm1337, %v2087, %v2089
    %v2097 = vsel %vm1337, %v2085, %v2087
    %v2098 = vsel %vm1337, %v2083, %v2085
    %v2099 = vsel %vm1337, %v2081, %v2083
    %v2100 = vsel %vm1337, %v2079, %v2081
    %v2101 = vsel %vm1337, %v2093, %v2079
    %v2102 = vld [vmem:[%s1346] ss:$8 sm:$0xf]
    %v2103 = vld [vmem:[%s1346] ss:$8 sm:$0xf0]
    %v2104 = vor.u32 %v2102, %v2103
    %v2106 = vperm.slane %v2104, 0
    %v2107 = vperm.slane %v2104, 1
    %v2108 = vperm.slane %v2104, 2
    %v2109 = vperm.slane %v2104, 3
    %v2110 = vperm.slane %v2104, 4
    %v2111 = vperm.slane %v2104, 5
    %v2112 = vperm.slane %v2104, 6
    %v2113 = vperm.slane %v2104, 7
    %v2122 = vmul.f32 %v2100, %v2106
    %v2123 = vmul.f32 %v2099, %v2107
    %v2124 = vmul.f32 %v2098, %v2108
    %v2125 = vmul.f32 %v2097, %v2109
    %v2126 = vmul.f32 %v2096, %v2110
    %v2127 = vmul.f32 %v2095, %v2111
    %v2128 = vmul.f32 %v2094, %v2112
    %v2129 = vmul.f32 %v2101, %v2113
    %2130 = vrot.lane.b32.xlu0 %v878, 97
    %v2131 = vpop.permute.xlu0 %2130
    %2132 = vrot.lane.b32.xlu0 %v906, 97
    %v2133 = vpop.permute.xlu0 %2132
    %2134 = vrot.lane.b32.xlu0 %v934, 97
    %v2135 = vpop.permute.xlu0 %2134
    %2136 = vrot.lane.b32.xlu0 %v962, 97
    %v2137 = vpop.permute.xlu0 %2136
    %2138 = vrot.lane.b32.xlu0 %v990, 97
    %v2139 = vpop.permute.xlu0 %2138
    %2140 = vrot.lane.b32.xlu0 %v1018, 97
    %v2141 = vpop.permute.xlu0 %2140
    %2142 = vrot.lane.b32.xlu0 %v1046, 97
    %v2143 = vpop.permute.xlu0 %2142
    %2144 = vrot.lane.b32.xlu0 %v1074, 97
    %v2145 = vpop.permute.xlu0 %2144
    %v2146 = vsel %vm1391, %v2143, %v2145
    %v2147 = vsel %vm1391, %v2141, %v2143
    %v2148 = vsel %vm1391, %v2139, %v2141
    %v2149 = vsel %vm1391, %v2137, %v2139
    %v2150 = vsel %vm1391, %v2135, %v2137
    %v2151 = vsel %vm1391, %v2133, %v2135
    %v2152 = vsel %vm1391, %v2131, %v2133
    %v2153 = vsel %vm1391, %v2145, %v2131
    %v2154 = vld [vmem:[%s1400] ss:$8 sm:$0xf]
    %v2155 = vld [vmem:[%s1400] ss:$8 sm:$0xf0]
    %v2156 = vor.u32 %v2154, %v2155
    %v2158 = vperm.slane %v2156, 0
    %v2159 = vperm.slane %v2156, 1
    %v2160 = vperm.slane %v2156, 2
    %v2161 = vperm.slane %v2156, 3
    %v2162 = vperm.slane %v2156, 4
    %v2163 = vperm.slane %v2156, 5
    %v2164 = vperm.slane %v2156, 6
    %v2165 = vperm.slane %v2156, 7
    %v2174 = vmul.f32 %v2152, %v2158
    %v2175 = vmul.f32 %v2151, %v2159
    %v2176 = vmul.f32 %v2150, %v2160
    %v2177 = vmul.f32 %v2149, %v2161
    %v2178 = vmul.f32 %v2148, %v2162
    %v2179 = vmul.f32 %v2147, %v2163
    %v2180 = vmul.f32 %v2146, %v2164
    %v2181 = vmul.f32 %v2153, %v2165
    %2182 = vrot.lane.b32.xlu0 %v878, 96
    %v2183 = vpop.permute.xlu0 %2182
    %2184 = vrot.lane.b32.xlu0 %v906, 96
    %v2185 = vpop.permute.xlu0 %2184
    %2186 = vrot.lane.b32.xlu0 %v934, 96
    %v2187 = vpop.permute.xlu0 %2186
    %2188 = vrot.lane.b32.xlu0 %v962, 96
    %v2189 = vpop.permute.xlu0 %2188
    %2190 = vrot.lane.b32.xlu0 %v990, 96
    %v2191 = vpop.permute.xlu0 %2190
    %2192 = vrot.lane.b32.xlu0 %v1018, 96
    %v2193 = vpop.permute.xlu0 %2192
    %2194 = vrot.lane.b32.xlu0 %v1046, 96
    %v2195 = vpop.permute.xlu0 %2194
    %2196 = vrot.lane.b32.xlu0 %v1074, 96
    %v2197 = vpop.permute.xlu0 %2196
    %v2198 = vsel %vm1445, %v2195, %v2197
    %v2199 = vsel %vm1445, %v2193, %v2195
    %v2200 = vsel %vm1445, %v2191, %v2193
    %v2201 = vsel %vm1445, %v2189, %v2191
    %v2202 = vsel %vm1445, %v2187, %v2189
    %v2203 = vsel %vm1445, %v2185, %v2187
    %v2204 = vsel %vm1445, %v2183, %v2185
    %v2205 = vsel %vm1445, %v2197, %v2183
    %v2206 = vld [vmem:[%s1454] ss:$8 sm:$0xf]
    %v2207 = vld [vmem:[%s1454] ss:$8 sm:$0xf0]
    %v2208 = vor.u32 %v2206, %v2207
    %v2210 = vperm.slane %v2208, 0
    %v2211 = vperm.slane %v2208, 1
    %v2212 = vperm.slane %v2208, 2
    %v2213 = vperm.slane %v2208, 3
    %v2214 = vperm.slane %v2208, 4
    %v2215 = vperm.slane %v2208, 5
    %v2216 = vperm.slane %v2208, 6
    %v2217 = vperm.slane %v2208, 7
    %v2226 = vmul.f32 %v2204, %v2210
    %v2227 = vmul.f32 %v2203, %v2211
    %v2228 = vmul.f32 %v2202, %v2212
    %v2229 = vmul.f32 %v2201, %v2213
    %v2230 = vmul.f32 %v2200, %v2214
    %v2231 = vmul.f32 %v2199, %v2215
    %v2232 = vmul.f32 %v2198, %v2216
    %v2233 = vmul.f32 %v2205, %v2217
    %2234 = vrot.lane.b32.xlu0 %v878, 95
    %v2235 = vpop.permute.xlu0 %2234
    %2236 = vrot.lane.b32.xlu0 %v906, 95
    %v2237 = vpop.permute.xlu0 %2236
    %2238 = vrot.lane.b32.xlu0 %v934, 95
    %v2239 = vpop.permute.xlu0 %2238
    %2240 = vrot.lane.b32.xlu0 %v962, 95
    %v2241 = vpop.permute.xlu0 %2240
    %2242 = vrot.lane.b32.xlu0 %v990, 95
    %v2243 = vpop.permute.xlu0 %2242
    %2244 = vrot.lane.b32.xlu0 %v1018, 95
    %v2245 = vpop.permute.xlu0 %2244
    %2246 = vrot.lane.b32.xlu0 %v1046, 95
    %v2247 = vpop.permute.xlu0 %2246
    %2248 = vrot.lane.b32.xlu0 %v1074, 95
    %v2249 = vpop.permute.xlu0 %2248
    %v2250 = vsel %vm1499, %v2247, %v2249
    %v2251 = vsel %vm1499, %v2245, %v2247
    %v2252 = vsel %vm1499, %v2243, %v2245
    %v2253 = vsel %vm1499, %v2241, %v2243
    %v2254 = vsel %vm1499, %v2239, %v2241
    %v2255 = vsel %vm1499, %v2237, %v2239
    %v2256 = vsel %vm1499, %v2235, %v2237
    %v2257 = vsel %vm1499, %v2249, %v2235
    %v2258 = vld [vmem:[%s1508] ss:$8 sm:$0xf]
    %v2259 = vld [vmem:[%s1508] ss:$8 sm:$0xf0]
    %v2260 = vor.u32 %v2258, %v2259
    %v2262 = vperm.slane %v2260, 0
    %v2263 = vperm.slane %v2260, 1
    %v2264 = vperm.slane %v2260, 2
    %v2265 = vperm.slane %v2260, 3
    %v2266 = vperm.slane %v2260, 4
    %v2267 = vperm.slane %v2260, 5
    %v2268 = vperm.slane %v2260, 6
    %v2269 = vperm.slane %v2260, 7
    %v2278 = vmul.f32 %v2256, %v2262
    %v2279 = vmul.f32 %v2255, %v2263
    %v2280 = vmul.f32 %v2254, %v2264
    %v2281 = vmul.f32 %v2253, %v2265
    %v2282 = vmul.f32 %v2252, %v2266
    %v2283 = vmul.f32 %v2251, %v2267
    %v2284 = vmul.f32 %v2250, %v2268
    %v2285 = vmul.f32 %v2257, %v2269
    %v2286 = vpack.c.bf16 %v1966, %v1914
    %v2287 = vpack.c.bf16 %v1967, %v1915
    %v2288 = vpack.c.bf16 %v1968, %v1916
    %v2289 = vpack.c.bf16 %v1969, %v1917
    %v2290 = vpack.c.bf16 %v1970, %v1918
    %v2291 = vpack.c.bf16 %v1971, %v1919
    %v2292 = vpack.c.bf16 %v1972, %v1920
    %v2293 = vpack.c.bf16 %v1973, %v1921
    %v2294 = vpack.c.bf16 %v2070, %v2018
    %v2295 = vpack.c.bf16 %v2071, %v2019
    %v2296 = vpack.c.bf16 %v2072, %v2020
    %v2297 = vpack.c.bf16 %v2073, %v2021
    %v2298 = vpack.c.bf16 %v2074, %v2022
    %v2299 = vpack.c.bf16 %v2075, %v2023
    %v2300 = vpack.c.bf16 %v2076, %v2024
    %v2301 = vpack.c.bf16 %v2077, %v2025
    %v2302 = vpack.c.bf16 %v2122, %v878
    %v2303 = vpack.c.bf16 %v2123, %v906
    %v2304 = vpack.c.bf16 %v2124, %v934
    %v2305 = vpack.c.bf16 %v2125, %v962
    %v2306 = vpack.c.bf16 %v2126, %v990
    %v2307 = vpack.c.bf16 %v2127, %v1018
    %v2308 = vpack.c.bf16 %v2128, %v1046
    %v2309 = vpack.c.bf16 %v2129, %v1074
    %v2310 = vpack.c.bf16 %v2226, %v2174
    %v2311 = vpack.c.bf16 %v2227, %v2175
    %v2312 = vpack.c.bf16 %v2228, %v2176
    %v2313 = vpack.c.bf16 %v2229, %v2177
    %v2314 = vpack.c.bf16 %v2230, %v2178
    %v2315 = vpack.c.bf16 %v2231, %v2179
    %v2316 = vpack.c.bf16 %v2232, %v2180
    %v2317 = vpack.c.bf16 %v2233, %v2181
    %v2318 = vpack.c.bf16 %v2278, %v2278
    %v2319 = vpack.c.bf16 %v2279, %v2279
    %v2320 = vpack.c.bf16 %v2280, %v2280
    %v2321 = vpack.c.bf16 %v2281, %v2281
    %v2322 = vpack.c.bf16 %v2282, %v2282
    %v2323 = vpack.c.bf16 %v2283, %v2283
    %v2324 = vpack.c.bf16 %v2284, %v2284
    %v2325 = vpack.c.bf16 %v2285, %v2285
    %v2327 = vsel %vm1596, %v2318, 0
    %v2330 = vsel %vm1596, %v2319, 0
    %v2333 = vsel %vm1596, %v2320, 0
    %v2336 = vsel %vm1596, %v2321, 0
    %v2339 = vsel %vm1596, %v2322, 0
    %v2342 = vsel %vm1596, %v2323, 0
    %v2345 = vsel %vm1596, %v2324, 0
    %v2348 = vsel %vm1596, %v2325, 0
    %2350 = vmatpush.bf16.msra.mxu0 0
    %2351 = vmatpush.bf16.msra.mxu0 0
    %2352 = vmatpush.bf16.msra.mxu0 0
    %2353 = vmatpush.bf16.msra.mxu0 %v2327
    %2354 = vmatpush.bf16.msra.mxu0 %v2310
    %2355 = vmatpush.bf16.msra.mxu0 %v2302
    %2356 = vmatpush.bf16.msra.mxu0 %v2294
    %2357 = vmatpush.bf16.msra.mxu0 %v2286
    %2358 = vmatmul.bf16.gmra.mxu0 %v1594
    %v2359 = vpop.f32.mrf.mxu0
    %v2360 = vadd.f32 %v1580, %v2359
    %v2361 = vpop.f32.mrf.mxu0
    %v2362 = vadd.f32 %v1585, %v2361
    %2363 = vdwg.mxu0
    %2364 = vmatpush.bf16.msra.mxu0 0
    %2365 = vmatpush.bf16.msra.mxu0 0
    %2366 = vmatpush.bf16.msra.mxu0 0
    %2367 = vmatpush.bf16.msra.mxu0 %v2330
    %2368 = vmatpush.bf16.msra.mxu0 %v2311
    %2369 = vmatpush.bf16.msra.mxu0 %v2303
    %2370 = vmatpush.bf16.msra.mxu0 %v2295
    %2371 = vmatpush.bf16.msra.mxu0 %v2287
    %2372 = vmatmul.bf16.gmra.mxu0 %v1594
    %v2373 = vpop.f32.mrf.mxu0
    %v2374 = vadd.f32 %v1580, %v2373
    %v2375 = vpop.f32.mrf.mxu0
    %v2376 = vadd.f32 %v1585, %v2375
    %2377 = vdwg.mxu0
    %2378 = vmatpush.bf16.msra.mxu0 0
    %2379 = vmatpush.bf16.msra.mxu0 0
    %2380 = vmatpush.bf16.msra.mxu0 0
    %2381 = vmatpush.bf16.msra.mxu0 %v2333
    %2382 = vmatpush.bf16.msra.mxu0 %v2312
    %2383 = vmatpush.bf16.msra.mxu0 %v2304
    %2384 = vmatpush.bf16.msra.mxu0 %v2296
    %2385 = vmatpush.bf16.msra.mxu0 %v2288
    %2386 = vmatmul.bf16.gmra.mxu0 %v1594
    %v2387 = vpop.f32.mrf.mxu0
    %v2388 = vadd.f32 %v1580, %v2387
    %v2389 = vpop.f32.mrf.mxu0
    %v2390 = vadd.f32 %v1585, %v2389
    %2391 = vdwg.mxu0
    %2392 = vmatpush.bf16.msra.mxu0 0
    %2393 = vmatpush.bf16.msra.mxu0 0
    %2394 = vmatpush.bf16.msra.mxu0 0
    %2395 = vmatpush.bf16.msra.mxu0 %v2336
    %2396 = vmatpush.bf16.msra.mxu0 %v2313
    %2397 = vmatpush.bf16.msra.mxu0 %v2305
    %2398 = vmatpush.bf16.msra.mxu0 %v2297
    %2399 = vmatpush.bf16.msra.mxu0 %v2289
    %2400 = vmatmul.bf16.gmra.mxu0 %v1594
    %v2401 = vpop.f32.mrf.mxu0
    %v2402 = vadd.f32 %v1580, %v2401
    %v2403 = vpop.f32.mrf.mxu0
    %v2404 = vadd.f32 %v1585, %v2403
    %2405 = vdwg.mxu0
    %2406 = vmatpush.bf16.msra.mxu0 0
    %2407 = vmatpush.bf16.msra.mxu0 0
    %2408 = vmatpush.bf16.msra.mxu0 0
    %2409 = vmatpush.bf16.msra.mxu0 %v2339
    %2410 = vmatpush.bf16.msra.mxu0 %v2314
    %2411 = vmatpush.bf16.msra.mxu0 %v2306
    %2412 = vmatpush.bf16.msra.mxu0 %v2298
    %2413 = vmatpush.bf16.msra.mxu0 %v2290
    %2414 = vmatmul.bf16.gmra.mxu0 %v1594
    %v2415 = vpop.f32.mrf.mxu0
    %v2416 = vadd.f32 %v1580, %v2415
    %v2417 = vpop.f32.mrf.mxu0
    %v2418 = vadd.f32 %v1585, %v2417
    %2419 = vdwg.mxu0
    %2420 = vmatpush.bf16.msra.mxu0 0
    %2421 = vmatpush.bf16.msra.mxu0 0
    %2422 = vmatpush.bf16.msra.mxu0 0
    %2423 = vmatpush.bf16.msra.mxu0 %v2342
    %2424 = vmatpush.bf16.msra.mxu0 %v2315
    %2425 = vmatpush.bf16.msra.mxu0 %v2307
    %2426 = vmatpush.bf16.msra.mxu0 %v2299
    %2427 = vmatpush.bf16.msra.mxu0 %v2291
    %2428 = vmatmul.bf16.gmra.mxu0 %v1594
    %v2429 = vpop.f32.mrf.mxu0
    %v2430 = vadd.f32 %v1580, %v2429
    %v2431 = vpop.f32.mrf.mxu0
    %v2432 = vadd.f32 %v1585, %v2431
    %2433 = vdwg.mxu0
    %2434 = vmatpush.bf16.msra.mxu0 0
    %2435 = vmatpush.bf16.msra.mxu0 0
    %2436 = vmatpush.bf16.msra.mxu0 0
    %2437 = vmatpush.bf16.msra.mxu0 %v2345
    %2438 = vmatpush.bf16.msra.mxu0 %v2316
    %2439 = vmatpush.bf16.msra.mxu0 %v2308
    %2440 = vmatpush.bf16.msra.mxu0 %v2300
    %2441 = vmatpush.bf16.msra.mxu0 %v2292
    %2442 = vmatmul.bf16.gmra.mxu0 %v1594
    %v2443 = vpop.f32.mrf.mxu0
    %v2444 = vadd.f32 %v1580, %v2443
    %v2445 = vpop.f32.mrf.mxu0
    %v2446 = vadd.f32 %v1585, %v2445
    %2447 = vdwg.mxu0
    %2448 = vmatpush.bf16.msra.mxu0 0
    %2449 = vmatpush.bf16.msra.mxu0 0
    %2450 = vmatpush.bf16.msra.mxu0 0
    %2451 = vmatpush.bf16.msra.mxu0 %v2348
    %2452 = vmatpush.bf16.msra.mxu0 %v2317
    %2453 = vmatpush.bf16.msra.mxu0 %v2309
    %2454 = vmatpush.bf16.msra.mxu0 %v2301
    %2455 = vmatpush.bf16.msra.mxu0 %v2293
    %2456 = vmatmul.bf16.gmra.mxu0 %v1594
    %v2457 = vpop.f32.mrf.mxu0
    %v2458 = vadd.f32 %v1580, %v2457
    %v2459 = vpop.f32.mrf.mxu0
    %v2460 = vadd.f32 %v1585, %v2459
    %2461 = vdwg.mxu0
    %vm2462 = vcmp.gt.f32.partialorder %v2360, 0.0
    %vm2463 = vcmp.gt.f32.partialorder %v2374, 0.0
    %vm2464 = vcmp.gt.f32.partialorder %v2388, 0.0
    %vm2465 = vcmp.gt.f32.partialorder %v2402, 0.0
    %vm2466 = vcmp.gt.f32.partialorder %v2416, 0.0
    %vm2467 = vcmp.gt.f32.partialorder %v2430, 0.0
    %vm2468 = vcmp.gt.f32.partialorder %v2444, 0.0
    %vm2469 = vcmp.gt.f32.partialorder %v2458, 0.0
    %v2470 = vmul.f32 %v2360, 0.05
    %v2471 = vmul.f32 %v2374, 0.05
    %v2472 = vmul.f32 %v2388, 0.05
    %v2473 = vmul.f32 %v2402, 0.05
    %v2474 = vmul.f32 %v2416, 0.05
    %v2475 = vmul.f32 %v2430, 0.05
    %v2476 = vmul.f32 %v2444, 0.05
    %v2477 = vmul.f32 %v2458, 0.05
    %v2478 = vsel %vm2462, %v2360, %v2470
    %v2479 = vsel %vm2463, %v2374, %v2471
    %v2480 = vsel %vm2464, %v2388, %v2472
    %v2481 = vsel %vm2465, %v2402, %v2473
    %v2482 = vsel %vm2466, %v2416, %v2474
    %v2483 = vsel %vm2467, %v2430, %v2475
    %v2484 = vsel %vm2468, %v2444, %v2476
    %v2485 = vsel %vm2469, %v2458, %v2477
    %vm2486 = vcmp.gt.f32.partialorder %v2478, 0.0
    %vm2487 = vcmp.gt.f32.partialorder %v2479, 0.0
    %vm2488 = vcmp.gt.f32.partialorder %v2480, 0.0
    %vm2489 = vcmp.gt.f32.partialorder %v2481, 0.0
    %vm2490 = vcmp.gt.f32.partialorder %v2482, 0.0
    %vm2491 = vcmp.gt.f32.partialorder %v2483, 0.0
    %vm2492 = vcmp.gt.f32.partialorder %v2484, 0.0
    %vm2493 = vcmp.gt.f32.partialorder %v2485, 0.0
    %v2494 = vmul.f32 %v2478, 0.05
    %v2495 = vmul.f32 %v2479, 0.05
    %v2496 = vmul.f32 %v2480, 0.05
    %v2497 = vmul.f32 %v2481, 0.05
    %v2498 = vmul.f32 %v2482, 0.05
    %v2499 = vmul.f32 %v2483, 0.05
    %v2500 = vmul.f32 %v2484, 0.05
    %v2501 = vmul.f32 %v2485, 0.05
    %v2502 = vsel %vm2486, %v2478, %v2494
    %v2503 = vsel %vm2487, %v2479, %v2495
    %v2504 = vsel %vm2488, %v2480, %v2496
    %v2505 = vsel %vm2489, %v2481, %v2497
    %v2506 = vsel %vm2490, %v2482, %v2498
    %v2507 = vsel %vm2491, %v2483, %v2499
    %v2508 = vsel %vm2492, %v2484, %v2500
    %v2509 = vsel %vm2493, %v2485, %v2501
    %vm2510 = vcmp.gt.f32.partialorder %v2362, 0.0
    %vm2511 = vcmp.gt.f32.partialorder %v2376, 0.0
    %vm2512 = vcmp.gt.f32.partialorder %v2390, 0.0
    %vm2513 = vcmp.gt.f32.partialorder %v2404, 0.0
    %vm2514 = vcmp.gt.f32.partialorder %v2418, 0.0
    %vm2515 = vcmp.gt.f32.partialorder %v2432, 0.0
    %vm2516 = vcmp.gt.f32.partialorder %v2446, 0.0
    %vm2517 = vcmp.gt.f32.partialorder %v2460, 0.0
    %v2518 = vmul.f32 %v2362, 0.05
    %v2519 = vmul.f32 %v2376, 0.05
    %v2520 = vmul.f32 %v2390, 0.05
    %v2521 = vmul.f32 %v2404, 0.05
    %v2522 = vmul.f32 %v2418, 0.05
    %v2523 = vmul.f32 %v2432, 0.05
    %v2524 = vmul.f32 %v2446, 0.05
    %v2525 = vmul.f32 %v2460, 0.05
    %v2526 = vsel %vm2510, %v2362, %v2518
    %v2527 = vsel %vm2511, %v2376, %v2519
    %v2528 = vsel %vm2512, %v2390, %v2520
    %v2529 = vsel %vm2513, %v2404, %v2521
    %v2530 = vsel %vm2514, %v2418, %v2522
    %v2531 = vsel %vm2515, %v2432, %v2523
    %v2532 = vsel %vm2516, %v2446, %v2524
    %v2533 = vsel %vm2517, %v2460, %v2525
    %v2534 = vadd.f32 %v2502, %v2526
    %v2535 = vadd.f32 %v2503, %v2527
    %v2536 = vadd.f32 %v2504, %v2528
    %v2537 = vadd.f32 %v2505, %v2529
    %v2538 = vadd.f32 %v2506, %v2530
    %v2539 = vadd.f32 %v2507, %v2531
    %v2540 = vadd.f32 %v2508, %v2532
    %v2541 = vadd.f32 %v2509, %v2533
    %vm2542 = vcmp.gt.f32.partialorder %v2534, 0.0
    %vm2543 = vcmp.gt.f32.partialorder %v2535, 0.0
    %vm2544 = vcmp.gt.f32.partialorder %v2536, 0.0
    %vm2545 = vcmp.gt.f32.partialorder %v2537, 0.0
    %vm2546 = vcmp.gt.f32.partialorder %v2538, 0.0
    %vm2547 = vcmp.gt.f32.partialorder %v2539, 0.0
    %vm2548 = vcmp.gt.f32.partialorder %v2540, 0.0
    %vm2549 = vcmp.gt.f32.partialorder %v2541, 0.0
    %v2550 = vmul.f32 %v2534, 0.05
    %v2551 = vmul.f32 %v2535, 0.05
    %v2552 = vmul.f32 %v2536, 0.05
    %v2553 = vmul.f32 %v2537, 0.05
    %v2554 = vmul.f32 %v2538, 0.05
    %v2555 = vmul.f32 %v2539, 0.05
    %v2556 = vmul.f32 %v2540, 0.05
    %v2557 = vmul.f32 %v2541, 0.05
    %v2558 = vsel %vm2542, %v2534, %v2550
    %v2559 = vsel %vm2543, %v2535, %v2551
    %v2560 = vsel %vm2544, %v2536, %v2552
    %v2561 = vsel %vm2545, %v2537, %v2553
    %v2562 = vsel %vm2546, %v2538, %v2554
    %v2563 = vsel %vm2547, %v2539, %v2555
    %v2564 = vsel %vm2548, %v2540, %v2556
    %v2565 = vsel %vm2549, %v2541, %v2557
    %s2566 = scalar_lea.vmem [#allocation8], 64
    %2567 = vst [vmem:[%s2566] sm:$0xff] %v2558
    %2568 = vst [vmem:[%s2566 + $0x8] sm:$0xff] %v2559
    %2569 = vst [vmem:[%s2566 + $0x10] sm:$0xff] %v2560
    %2570 = vst [vmem:[%s2566 + $0x18] sm:$0xff] %v2561
    %2571 = vst [vmem:[%s2566 + $0x20] sm:$0xff] %v2562
    %2572 = vst [vmem:[%s2566 + $0x28] sm:$0xff] %v2563
    %2573 = vst [vmem:[%s2566 + $0x30] sm:$0xff] %v2564
    %2574 = vst [vmem:[%s2566 + $0x38] sm:$0xff] %v2565
    // Predicated region
    $region34: #{tpu_custom_call.1} parent=1 // pred_check
      _
    $region35: #{tpu_custom_call.1} parent=1 // pred_check_branch
      %2576 = sbr.rel (0) target = $region37
    $region36: #{tpu_custom_call.1} parent=1 // pred_region
      %2578 = vsyncadd [#allocation4], 0
      %s2579 = sshll.u32 [#allocation8], 4
      %s2580 = int_to_ptr.vmem [resolvable:$true] %s2579
      %s2581 = sshll.u32 %s5, 4
      %s2582 = int_to_ptr.hbm [resolvable:$true] %s2581
      %2587 = dma.vmem_to_hbm [thread:$0]  %s2580, 2048, %s2582, [#allocation4], 1024, 1024, 64
    $region37: #{tpu_custom_call.1} parent=1 // pred_fallthru
      _
    // Predicated region
    $region38: #{tpu_custom_call.1} parent=1 // pred_check
      _
    $region39: #{tpu_custom_call.1} parent=1 // pred_check_branch
      %2589 = sbr.rel (0) target = $region41
    $region40: #{tpu_custom_call.1} parent=1 // pred_region
      %2591 = vsyncadd [#allocation10], 0
      %s2592 = sshll.u32 [#allocation9], 4
      %s2593 = int_to_ptr.vmem [resolvable:$true] %s2592
      %s2594 = sshll.u32 %s6, 4
      %s2595 = int_to_ptr.hbm [resolvable:$true] %s2594
      %2600 = dma.vmem_to_hbm [thread:$0]  %s2593, 512, %s2595, [#allocation10], 256, 256, 16
    $region41: #{tpu_custom_call.1} parent=1 // pred_fallthru
      _
    // Predicated region
    $region42: #{tpu_custom_call.1} parent=1 // pred_check
      _
    $region43: #{tpu_custom_call.1} parent=1 // pred_check_branch
      %2602 = sbr.rel (0) target = $region45
    $region44: #{tpu_custom_call.1} parent=1 // pred_region
      %2604 = dma.done [#allocation4], 2048
    $region45: #{tpu_custom_call.1} parent=1 // pred_fallthru
      _
    // Predicated region
    $region46: #{tpu_custom_call.1} parent=1 // pred_check
      _
    $region47: #{tpu_custom_call.1} parent=1 // pred_check_branch
      %2606 = sbr.rel (0) target = $region49
    $region48: #{tpu_custom_call.1} parent=1 // pred_region
      %2608 = dma.done [#allocation10], 512
    $region49: #{tpu_custom_call.1} parent=1 // pred_fallthru
      _
    %2609 = vsyncpa [#allocation3], 1
    %2610 = vsyncpa [#allocation6], 1
    %2611 = vsyncpa [#allocation4], 1
    %2612 = vsyncpa [#allocation10], 1

</llo_original>
